<compile_context>
chip_gen: v7x
topology: tpu7x:2x2x1
jax: 0.10.0
libtpu: 0.0.40
codegen_flags: <defaults>
</compile_context>

<pallas_src>
import functools

import jax
import jax.numpy as jnp
from jax import lax
from jax.experimental import pallas as pl
from jax.experimental.pallas import tpu as pltpu


def _flow_attention_layer_kernel(q_in_ref, k_in_ref, v_in_ref,
                                 wq_ref, bq_ref, wk_ref, bk_ref,
                                 wv_ref, bv_ref, wo_ref, bo_ref,
                                 seg_e_ref, exp_e_ref, exp_d_ref, mask_g_ref,
                                 out_ref,
                                 q_scr, k_scr, v_scr,
                                 *, n_heads, d_keys, d_values, L, S, group,
                                 mm_dtype):
    """One grid step = one block of BB batch elements."""
    eps = 1e-6
    f32 = jnp.float32
    H, E, D = n_heads, d_keys, d_values
    HE, HD = H * E, H * D
    G = group
    GE, GD = G * E, G * D
    n_groups = H // G
    BB = q_in_ref.shape[0]
    d_model = q_in_ref.shape[-1]
    ratio = float(L) / float(S)

    def mm(x, w):
        # MXU matmul with selectable operand dtype (bf16 recommended on
        # v5e/v6e/v7x), f32 accumulation.
        return jnp.dot(x.astype(mm_dtype), w.astype(mm_dtype),
                       preferred_element_type=f32)

    def segmm(x, w):
        # Tiny per-head segment-reduce / broadcast matmuls stay in f32 (the
        # eps terms are below bf16 resolution).  Only move these off the MXU
        # if a bundle dump shows the vmatmul slot is the bottleneck.
        return jnp.dot(x, w, preferred_element_type=f32)

    # ---- fused Q/K/V projections: one big matmul each (M = BB*L / BB*S) ----
    qin = q_in_ref[...].reshape(BB * L, d_model)
    kin = k_in_ref[...].reshape(BB * S, d_model)
    vin = v_in_ref[...].reshape(BB * S, d_model)
    q_scr[...] = jax.nn.sigmoid(mm(qin, wq_ref[...]) + bq_ref[...])   # [BB*L, HE]
    k_scr[...] = jax.nn.sigmoid(mm(kin, wk_ref[...]) + bk_ref[...])   # [BB*S, HE]
    v_scr[...] = mm(vin, wv_ref[...]) + bv_ref[...]                   # [BB*S, HD]

    def body(b, carry):
        rq = pl.multiple_of(b * L, L)
        rk = pl.multiple_of(b * S, S)
        q = q_scr[pl.ds(rq, L), :]          # [L, HE] f32
        k = k_scr[pl.ds(rk, S), :]          # [S, HE]
        v = v_scr[pl.ds(rk, S), :]          # [S, HD]

        seg_e = seg_e_ref[...]              # [HE, H]  per-head E-lane sum
        exp_e = exp_e_ref[...]              # [H, HE]  per-head -> E lanes
        exp_d = exp_d_ref[...]              # [H, HD]  per-head -> D lanes

        k_sum = jnp.sum(k, axis=0, keepdims=True)            # [1, HE]
        q_sum = jnp.sum(q, axis=0, keepdims=True)            # [1, HE]
        q_eps = q + eps
        k_eps = k + eps

        # (1) incoming / outgoing flow (all heads at once, lane-dense)
        sink_incoming = 1.0 / segmm(q_eps * (k_sum + eps), seg_e)     # [L, H]
        source_outgoing = 1.0 / segmm(k_eps * (q_sum + eps), seg_e)   # [S, H]
        sink_in_e = segmm(sink_incoming, exp_e)                       # [L, HE]
        source_out_e = segmm(source_outgoing, exp_e)                  # [S, HE]

        # (2) conservation refinement
        kw = jnp.sum(k * source_out_e, axis=0, keepdims=True)         # [1, HE]
        qw = jnp.sum(q * sink_in_e, axis=0, keepdims=True)            # [1, HE]
        conserved_sink = segmm(q_eps * (kw + eps), seg_e)             # [L, H]
        conserved_source = segmm(k_eps * (qw + eps), seg_e)           # [S, H]
        conserved_source = jnp.maximum(conserved_source, eps)

        # (3) competition & allocation
        sink_allocation = jax.nn.sigmoid(conserved_sink * ratio)               # [L, H]
        source_competition = jax.nn.softmax(conserved_source, axis=0) * float(S)  # [S, H]

        alloc_d = segmm(sink_allocation, exp_d)                       # [L, HD]
        comp_d = segmm(source_competition, exp_d)                     # [S, HD]
        v_w = v * comp_d                                              # [S, HD]
        q_w = q * sink_in_e                                           # [L, HE]

        # (4) attention core per head-group of G heads (GE/GD lanes ~ MXU
        # width), then the output projection accumulated per group (K-split),
        # so no lane-axis concat and only G× (not H×) masked redundancy.
        acc = jnp.zeros((L, d_model), f32)
        for g in range(n_groups):
            e0, e1 = g * GE, (g + 1) * GE
            d0, d1 = g * GD, (g + 1) * GD
            kg = k[:, e0:e1].astype(mm_dtype)                         # [S, GE]
            vg = v_w[:, d0:d1].astype(mm_dtype)                       # [S, GD]
            # k_g^T @ v_g: contraction over the sequence axis; Mosaic maps the
            # contracted-dim-0 LHS straight onto the MXU (no XLU transpose).
            kv_g = lax.dot_general(kg, vg, (((0,), (0,)), ((), ())),
                                   preferred_element_type=f32)        # [GE, GD]
            if G > 1:
                kv_g = kv_g * mask_g_ref[...]                          # block-diag head mask
            xg = mm(q_w[:, e0:e1], kv_g) * alloc_d[:, d0:d1]           # [L, GD]
            acc = acc + mm(xg, wo_ref[d0:d1, :])                       # [L, d_model]

        # TODO(synk): Flow_Attention's nn.Dropout(0.05) is identity in eval mode — skipped.
        out_ref[b] = (acc + bo_ref[...]).astype(out_ref.dtype)
        return carry

    lax.fori_loop(0, BB, body, 0, unroll=min(2, BB))


def _hw_params():
    """Generation-aware VMEM capacity and MXU lane-width target."""
    vmem_capacity = 64 * 1024 * 1024       # conservative default (v7x per-TC)
    lane_target = 256                      # MXU lane width on v6e/v7x (128 on v5e)
    try:
        info = pltpu.get_tpu_info()
        vmem_capacity = int(getattr(info, "vmem_capacity_bytes", vmem_capacity))
        for name in ("mxu_size", "mxu_width", "mxu_column_count"):
            v = getattr(info, name, None)
            if v:
                lane_target = int(v)
                break
    except Exception:
        pass
    return vmem_capacity, lane_target


def _pick_head_group(n_heads, d_keys, d_values, lane_target):
    """Heads per attention-core group: fill ~the MXU lane width per group."""
    g = max(1, lane_target // max(d_keys, d_values))
    g = min(g, n_heads)
    while n_heads % g:
        g += 1
    return g


def _head_constants(n_heads, d_keys, d_values, group):
    """Host-built segment-reduce / expand / group-mask constants (hoisted)."""
    H, E, D = n_heads, d_keys, d_values
    HE, HD = H * E, H * D
    GE, GD = group * E, group * D
    f32 = jnp.float32
    ar = jnp.arange
    seg_e = (ar(HE)[:, None] // E == ar(H)[None, :]).astype(f32)        # [HE, H]
    exp_e = (ar(H)[:, None] == ar(HE)[None, :] // E).astype(f32)        # [H, HE]
    exp_d = (ar(H)[:, None] == ar(HD)[None, :] // D).astype(f32)        # [H, HD]
    mask_g = (ar(GE)[:, None] // E == ar(GD)[None, :] // D).astype(f32)  # [GE, GD]
    return seg_e, exp_e, exp_d, mask_g


def _block_vmem_bytes(bb, *, L, S, d_model, HE, HD, in_itemsize, out_itemsize,
                      fixed_bytes):
    """Estimated per-grid-step VMEM working set for a batch block of bb."""
    qkv_in = 2 * (bb * L * d_model + 2 * bb * S * d_model) * in_itemsize  # double-buffered
    out = 2 * bb * L * d_model * out_itemsize                             # double-buffered
    scratch = 4 * (bb * L * HE + bb * S * (HE + HD))                      # f32 q/k/v scratch
    slack = 8 * 1024 * 1024                                               # per-iter temps + compiler scratch
    return qkv_in + out + scratch + fixed_bytes + slack


def _pick_batch_block(B, vmem_budget, block_bytes_fn):
    divisors = [d for d in range(1, B + 1) if B % d == 0]
    fitting = [d for d in divisors if block_bytes_fn(d) <= vmem_budget] or [1]

    def rank(d):
        steps = B // d
        # Prefer >=2 grid steps with an even count (v7x: 2 TensorCores shard
        # the "parallel" axis), then the biggest block that fits the budget.
        return (steps >= 2 and steps % 2 == 0, steps >= 2, d)

    return max(fitting, key=rank)


def attention_layer_forward(queries, keys, values, params, n_heads,
                            *, batch_block=None, matmul_dtype=None):
    """Pallas forward for AttentionLayer(Flow_Attention, d_model, n_heads)."""
    wq, bq, wk, bk, wv, bv, wo, bo = params
    B, L, d_model = queries.shape
    _, S, _ = keys.shape
    d_keys = wq.shape[1] // n_heads
    d_values = wv.shape[1] // n_heads
    HE, HD = n_heads * d_keys, n_heads * d_values

    if matmul_dtype is None:
        # Default: MXU operand dtype follows the inputs (exact f32 parity with
        # the PyTorch module).  For production throughput pass
        # matmul_dtype=jnp.bfloat16: the MXUs are bf16-native on v5e/v6e/v7x
        # and the flow statistics / eps path stays in f32 regardless.
        matmul_dtype = queries.dtype
    matmul_dtype = jnp.dtype(matmul_dtype)

    vmem_capacity, lane_target = _hw_params()
    group = _pick_head_group(n_heads, d_keys, d_values, lane_target)
    seg_e, exp_e, exp_d, mask_g = _head_constants(n_heads, d_keys, d_values, group)

    weight_bytes = sum(int(w.size) * w.dtype.itemsize for w in params)
    const_bytes = sum(int(c.size) * c.dtype.itemsize
                      for c in (seg_e, exp_e, exp_d, mask_g))
    # TODO(synk): constant weight/bias/mask blocks could be single-buffered via
    # pipeline_mode=pl.Buffered(1); kept on default buffering and charged 2x
    # in the VMEM budget instead.
    fixed_bytes = 2 * (weight_bytes + const_bytes)

    block_bytes = functools.partial(
        _block_vmem_bytes, L=L, S=S, d_model=d_model, HE=HE, HD=HD,
        in_itemsize=queries.dtype.itemsize,
        out_itemsize=queries.dtype.itemsize,
        fixed_bytes=fixed_bytes)

    if batch_block is None:
        batch_block = _pick_batch_block(B, int(0.70 * vmem_capacity), block_bytes)
    if B % batch_block != 0:
        raise ValueError(f"batch_block={batch_block} must divide B={B}")

    vmem_limit = int(min(0.85 * vmem_capacity,
                         max(block_bytes(batch_block), 32 * 1024 * 1024)))

    kernel = functools.partial(
        _flow_attention_layer_kernel,
        n_heads=n_heads, d_keys=d_keys, d_values=d_values, L=L, S=S,
        group=group, mm_dtype=matmul_dtype)

    def full_spec(arr):
        nd = arr.ndim
        return pl.BlockSpec(arr.shape, lambda b, _nd=nd: (0,) * _nd)

    return pl.pallas_call(
        kernel,
        out_shape=jax.ShapeDtypeStruct((B, L, d_model), queries.dtype),
        grid=(B // batch_block,),
        in_specs=[
            pl.BlockSpec((batch_block, L, d_model), lambda b: (b, 0, 0)),   # queries
            pl.BlockSpec((batch_block, S, d_model), lambda b: (b, 0, 0)),   # keys
            pl.BlockSpec((batch_block, S, d_model), lambda b: (b, 0, 0)),   # values
            full_spec(wq), full_spec(bq),
            full_spec(wk), full_spec(bk),
            full_spec(wv), full_spec(bv),
            full_spec(wo), full_spec(bo),
            full_spec(seg_e), full_spec(exp_e), full_spec(exp_d), full_spec(mask_g),
        ],
        out_specs=pl.BlockSpec((batch_block, L, d_model), lambda b: (b, 0, 0)),
        scratch_shapes=[
            pltpu.VMEM((batch_block * L, HE), jnp.float32),   # sigmoid(Q)
            pltpu.VMEM((batch_block * S, HE), jnp.float32),   # sigmoid(K)
            pltpu.VMEM((batch_block * S, HD), jnp.float32),   # V
        ],
        compiler_params=pltpu.CompilerParams(
            dimension_semantics=("parallel",),
            vmem_limit_bytes=vmem_limit),
    )(queries, keys, values, wq, bq, wk, bk, wv, bv, wo, bo,
      seg_e, exp_e, exp_d, mask_g)


def reference_forward(queries, keys, values, params, n_heads):
    """Plain-JAX mirror of AttentionLayer + Flow_Attention (eval mode)."""
    wq, bq, wk, bk, wv, bv, wo, bo = params
    B, L, _ = queries.shape
    _, S, _ = keys.shape
    eps = 1e-6
    q = (queries @ wq + bq).reshape(B, L, n_heads, -1).transpose(0, 2, 1, 3)
    k = (keys @ wk + bk).reshape(B, S, n_heads, -1).transpose(0, 2, 1, 3)
    v = (values @ wv + bv).reshape(B, S, n_heads, -1).transpose(0, 2, 1, 3)
    q = jax.nn.sigmoid(q)
    k = jax.nn.sigmoid(k)
    sink_incoming = 1.0 / jnp.einsum("nhld,nhd->nhl", q + eps, k.sum(2) + eps)
    source_outgoing = 1.0 / jnp.einsum("nhld,nhd->nhl", k + eps, q.sum(2) + eps)
    conserved_sink = jnp.einsum("nhld,nhd->nhl", q + eps,
                                (k * source_outgoing[..., None]).sum(2) + eps)
    conserved_source = jnp.einsum("nhld,nhd->nhl", k + eps,
                                  (q * sink_incoming[..., None]).sum(2) + eps)
    conserved_source = jnp.maximum(conserved_source, eps)
    sink_allocation = jax.nn.sigmoid(conserved_sink * (float(L) / float(S)))
    source_competition = jax.nn.softmax(conserved_source, axis=-1) * float(S)
    kv = jnp.einsum("nhld,nhlm->nhdm", k, v * source_competition[..., None])
    x = (jnp.einsum("nhld,nhdm->nhlm", q * sink_incoming[..., None], kv)
         * sink_allocation[..., None])
    x = x.transpose(0, 2, 1, 3).reshape(B, L, -1)
    return x @ wo + bo


if __name__ == "__main__":
    B, L, S, d_model, n_heads = 2, 8, 8, 32, 4
    d_keys = d_model // n_heads
    d_values = d_model // n_heads

    key = jax.random.PRNGKey(0)
    ks = jax.random.split(key, 12)
    queries = jax.random.normal(ks[0], (B, L, d_model), jnp.float32)
    keys_in = jax.random.normal(ks[1], (B, S, d_model), jnp.float32)
    values_in = jax.random.normal(ks[2], (B, S, d_model), jnp.float32)

    scale = 0.1
    params = (
        scale * jax.random.normal(ks[3], (d_model, d_keys * n_heads), jnp.float32),
        scale * jax.random.normal(ks[4], (1, d_keys * n_heads), jnp.float32),
        scale * jax.random.normal(ks[5], (d_model, d_keys * n_heads), jnp.float32),
        scale * jax.random.normal(ks[6], (1, d_keys * n_heads), jnp.float32),
        scale * jax.random.normal(ks[7], (d_model, d_values * n_heads), jnp.float32),
        scale * jax.random.normal(ks[8], (1, d_values * n_heads), jnp.float32),
        scale * jax.random.normal(ks[9], (d_values * n_heads, d_model), jnp.float32),
        scale * jax.random.normal(ks[10], (1, d_model), jnp.float32),
    )

    ref = reference_forward(queries, keys_in, values_in, params, n_heads)

    # default heuristic (f32 MXU operands -> exact parity with the reference)
    out = attention_layer_forward(queries, keys_in, values_in, params, n_heads)
    out = jax.block_until_ready(out)
    assert out.shape == (B, L, d_model)
    assert jnp.allclose(out, ref, rtol=1e-4, atol=1e-4), \
        f"max abs err = {jnp.max(jnp.abs(out - ref))}"

    # multi-batch-per-step path (fused [BB*L, d_model] projections, fori body)
    out_blocked = attention_layer_forward(queries, keys_in, values_in, params,
                                          n_heads, batch_block=2)
    out_blocked = jax.block_until_ready(out_blocked)
    assert jnp.allclose(out_blocked, ref, rtol=1e-4, atol=1e-4), \
        f"max abs err (blocked) = {jnp.max(jnp.abs(out_blocked - ref))}"

    # production path: bf16 MXU operands (f32 accumulation + f32 flow stats)
    out_bf16 = attention_layer_forward(queries, keys_in, values_in, params,
                                       n_heads, matmul_dtype=jnp.bfloat16)
    out_bf16 = jax.block_until_ready(out_bf16)
    assert jnp.max(jnp.abs(out_bf16 - ref)) < 1e-1, \
        f"max abs err (bf16) = {jnp.max(jnp.abs(out_bf16 - ref))}"

    print("KERNEL_OK")
</pallas_src>

<mosaic_0001>
module attributes {stable_mosaic.version = 11 : i64} {
  func.func @_flow_attention_layer_kernel(%arg0: i32, %arg1: memref<1x8x32xf32, #tpu.memory_space<vmem>>, %arg2: memref<1x8x32xf32, #tpu.memory_space<vmem>>, %arg3: memref<1x8x32xf32, #tpu.memory_space<vmem>>, %arg4: memref<32x32xf32, #tpu.memory_space<vmem>>, %arg5: memref<1x32xf32, #tpu.memory_space<vmem>>, %arg6: memref<32x32xf32, #tpu.memory_space<vmem>>, %arg7: memref<1x32xf32, #tpu.memory_space<vmem>>, %arg8: memref<32x32xf32, #tpu.memory_space<vmem>>, %arg9: memref<1x32xf32, #tpu.memory_space<vmem>>, %arg10: memref<32x32xf32, #tpu.memory_space<vmem>>, %arg11: memref<1x32xf32, #tpu.memory_space<vmem>>, %arg12: memref<32x4xf32, #tpu.memory_space<vmem>>, %arg13: memref<4x32xf32, #tpu.memory_space<vmem>>, %arg14: memref<4x32xf32, #tpu.memory_space<vmem>>, %arg15: memref<32x32xf32, #tpu.memory_space<vmem>>, %arg16: memref<1x8x32xf32, #tpu.memory_space<vmem>>, %arg17: memref<8x32xf32, #tpu.memory_space<vmem>>, %arg18: memref<8x32xf32, #tpu.memory_space<vmem>>, %arg19: memref<8x32xf32, #tpu.memory_space<vmem>>) attributes {dimension_semantics = [#tpu.dimension_semantics<parallel>], iteration_bounds = array<i64: 2>, scalar_prefetch = 0 : i64, scratch_operands = 3 : i64, tpu.core_type = #tpu.core_type<tc>, window_params = [{transform_indices = @transform_0, window_bounds = array<i64: 1, 8, 32>}, {transform_indices = @transform_1, window_bounds = array<i64: 1, 8, 32>}, {transform_indices = @transform_2, window_bounds = array<i64: 1, 8, 32>}, {pipeline_mode = #tpu.pipeline_mode<synchronous>, transform_indices = @transform_3, window_bounds = array<i64: 32, 32>}, {pipeline_mode = #tpu.pipeline_mode<synchronous>, transform_indices = @transform_4, window_bounds = array<i64: 1, 32>}, {pipeline_mode = #tpu.pipeline_mode<synchronous>, transform_indices = @transform_5, window_bounds = array<i64: 32, 32>}, {pipeline_mode = #tpu.pipeline_mode<synchronous>, transform_indices = @transform_6, window_bounds = array<i64: 1, 32>}, {pipeline_mode = #tpu.pipeline_mode<synchronous>, transform_indices = @transform_7, window_bounds = array<i64: 32, 32>}, {pipeline_mode = #tpu.pipeline_mode<synchronous>, transform_indices = @transform_8, window_bounds = array<i64: 1, 32>}, {pipeline_mode = #tpu.pipeline_mode<synchronous>, transform_indices = @transform_9, window_bounds = array<i64: 32, 32>}, {pipeline_mode = #tpu.pipeline_mode<synchronous>, transform_indices = @transform_10, window_bounds = array<i64: 1, 32>}, {pipeline_mode = #tpu.pipeline_mode<synchronous>, transform_indices = @transform_11, window_bounds = array<i64: 32, 4>}, {pipeline_mode = #tpu.pipeline_mode<synchronous>, transform_indices = @transform_12, window_bounds = array<i64: 4, 32>}, {pipeline_mode = #tpu.pipeline_mode<synchronous>, transform_indices = @transform_13, window_bounds = array<i64: 4, 32>}, {pipeline_mode = #tpu.pipeline_mode<synchronous>, transform_indices = @transform_14, window_bounds = array<i64: 32, 32>}, {transform_indices = @transform_15, window_bounds = array<i64: 1, 8, 32>}]} {
    %c0 = arith.constant 0 : index
    %c0_0 = arith.constant 0 : index
    %c0_1 = arith.constant 0 : index
    %0 = vector.load %arg1[%c0, %c0_0, %c0_1] : memref<1x8x32xf32, #tpu.memory_space<vmem>>, vector<1x8x32xf32>
    %1 = vector.shape_cast %0 : vector<1x8x32xf32> to vector<8x32xf32>
    %c0_2 = arith.constant 0 : index
    %c0_3 = arith.constant 0 : index
    %c0_4 = arith.constant 0 : index
    %2 = vector.load %arg2[%c0_2, %c0_3, %c0_4] : memref<1x8x32xf32, #tpu.memory_space<vmem>>, vector<1x8x32xf32>
    %3 = vector.shape_cast %2 : vector<1x8x32xf32> to vector<8x32xf32>
    %c0_5 = arith.constant 0 : index
    %c0_6 = arith.constant 0 : index
    %c0_7 = arith.constant 0 : index
    %4 = vector.load %arg3[%c0_5, %c0_6, %c0_7] : memref<1x8x32xf32, #tpu.memory_space<vmem>>, vector<1x8x32xf32>
    %5 = vector.shape_cast %4 : vector<1x8x32xf32> to vector<8x32xf32>
    %c0_8 = arith.constant 0 : index
    %c0_9 = arith.constant 0 : index
    %6 = vector.load %arg4[%c0_8, %c0_9] : memref<32x32xf32, #tpu.memory_space<vmem>>, vector<32x32xf32>
    %cst = arith.constant dense<0.000000e+00> : vector<8x32xf32>
    %7 = tpu.matmul %1, %6, %cst {dimension_numbers = #tpu.dot_dimension_numbers<[1], [0], [0], [1], [0, 0, 1, 1], [], []>} : vector<8x32xf32>, vector<32x32xf32>, vector<8x32xf32> -> vector<8x32xf32>
    %c0_10 = arith.constant 0 : index
    %c0_11 = arith.constant 0 : index
    %8 = vector.load %arg5[%c0_10, %c0_11] : memref<1x32xf32, #tpu.memory_space<vmem>>, vector<1x32xf32>
    %9 = vector.broadcast %8 : vector<1x32xf32> to vector<8x32xf32>
    %10 = arith.addf %7, %9 : vector<8x32xf32>
    %11 = arith.negf %10 : vector<8x32xf32>
    %12 = math.exp %11 : vector<8x32xf32>
    %cst_12 = arith.constant 1.000000e+00 : f32
    %13 = vector.broadcast %cst_12 : f32 to vector<8x32xf32>
    %14 = arith.addf %13, %12 : vector<8x32xf32>
    %15 = arith.divf %13, %14 : vector<8x32xf32>
    %c0_13 = arith.constant 0 : index
    %c0_14 = arith.constant 0 : index
    %16 = vector.load %arg17[%c0_13, %c0_14] : memref<8x32xf32, #tpu.memory_space<vmem>>, vector<8x32xf32>
    tpu.vector_store %arg17[%c0_13, %c0_14], %15 {strides = array<i32>} : memref<8x32xf32, #tpu.memory_space<vmem>>, vector<8x32xf32>,
    %c0_15 = arith.constant 0 : index
    %c0_16 = arith.constant 0 : index
    %17 = vector.load %arg6[%c0_15, %c0_16] : memref<32x32xf32, #tpu.memory_space<vmem>>, vector<32x32xf32>
    %cst_17 = arith.constant dense<0.000000e+00> : vector<8x32xf32>
    %18 = tpu.matmul %3, %17, %cst_17 {dimension_numbers = #tpu.dot_dimension_numbers<[1], [0], [0], [1], [0, 0, 1, 1], [], []>} : vector<8x32xf32>, vector<32x32xf32>, vector<8x32xf32> -> vector<8x32xf32>
    %c0_18 = arith.constant 0 : index
    %c0_19 = arith.constant 0 : index
    %19 = vector.load %arg7[%c0_18, %c0_19] : memref<1x32xf32, #tpu.memory_space<vmem>>, vector<1x32xf32>
    %20 = vector.broadcast %19 : vector<1x32xf32> to vector<8x32xf32>
    %21 = arith.addf %18, %20 : vector<8x32xf32>
    %22 = arith.negf %21 : vector<8x32xf32>
    %23 = math.exp %22 : vector<8x32xf32>
    %cst_20 = arith.constant 1.000000e+00 : f32
    %24 = vector.broadcast %cst_20 : f32 to vector<8x32xf32>
    %25 = arith.addf %24, %23 : vector<8x32xf32>
    %26 = arith.divf %24, %25 : vector<8x32xf32>
    %c0_21 = arith.constant 0 : index
    %c0_22 = arith.constant 0 : index
    %27 = vector.load %arg18[%c0_21, %c0_22] : memref<8x32xf32, #tpu.memory_space<vmem>>, vector<8x32xf32>
    tpu.vector_store %arg18[%c0_21, %c0_22], %26 {strides = array<i32>} : memref<8x32xf32, #tpu.memory_space<vmem>>, vector<8x32xf32>,
    %c0_23 = arith.constant 0 : index
    %c0_24 = arith.constant 0 : index
    %28 = vector.load %arg8[%c0_23, %c0_24] : memref<32x32xf32, #tpu.memory_space<vmem>>, vector<32x32xf32>
    %cst_25 = arith.constant dense<0.000000e+00> : vector<8x32xf32>
    %29 = tpu.matmul %5, %28, %cst_25 {dimension_numbers = #tpu.dot_dimension_numbers<[1], [0], [0], [1], [0, 0, 1, 1], [], []>} : vector<8x32xf32>, vector<32x32xf32>, vector<8x32xf32> -> vector<8x32xf32>
    %c0_26 = arith.constant 0 : index
    %c0_27 = arith.constant 0 : index
    %30 = vector.load %arg9[%c0_26, %c0_27] : memref<1x32xf32, #tpu.memory_space<vmem>>, vector<1x32xf32>
    %31 = vector.broadcast %30 : vector<1x32xf32> to vector<8x32xf32>
    %32 = arith.addf %29, %31 : vector<8x32xf32>
    %c0_28 = arith.constant 0 : index
    %c0_29 = arith.constant 0 : index
    %33 = vector.load %arg19[%c0_28, %c0_29] : memref<8x32xf32, #tpu.memory_space<vmem>>, vector<8x32xf32>
    tpu.vector_store %arg19[%c0_28, %c0_29], %32 {strides = array<i32>} : memref<8x32xf32, #tpu.memory_space<vmem>>, vector<8x32xf32>,
    %c0_i32 = arith.constant 0 : i32
    %c8_i32 = arith.constant 8 : i32
    %34 = arith.muli %c0_i32, %c8_i32 : i32
    %35 = tpu.assume_multiple %34, 8 : i32
    %c8_i32_30 = arith.constant 8 : i32
    %36 = arith.muli %c0_i32, %c8_i32_30 : i32
    %37 = tpu.assume_multiple %36, 8 : i32
    %38 = arith.index_cast %35 : i32 to index
    %c0_31 = arith.constant 0 : index
    %39 = vector.load %arg17[%38, %c0_31] : memref<8x32xf32, #tpu.memory_space<vmem>>, vector<8x32xf32>
    %40 = arith.index_cast %37 : i32 to index
    %c0_32 = arith.constant 0 : index
    %41 = vector.load %arg18[%40, %c0_32] : memref<8x32xf32, #tpu.memory_space<vmem>>, vector<8x32xf32>
    %42 = arith.index_cast %37 : i32 to index
    %c0_33 = arith.constant 0 : index
    %43 = vector.load %arg19[%42, %c0_33] : memref<8x32xf32, #tpu.memory_space<vmem>>, vector<8x32xf32>
    %c0_34 = arith.constant 0 : index
    %c0_35 = arith.constant 0 : index
    %44 = vector.load %arg12[%c0_34, %c0_35] : memref<32x4xf32, #tpu.memory_space<vmem>>, vector<32x4xf32>
    %c0_36 = arith.constant 0 : index
    %c0_37 = arith.constant 0 : index
    %45 = vector.load %arg13[%c0_36, %c0_37] : memref<4x32xf32, #tpu.memory_space<vmem>>, vector<4x32xf32>
    %c0_38 = arith.constant 0 : index
    %c0_39 = arith.constant 0 : index
    %46 = vector.load %arg14[%c0_38, %c0_39] : memref<4x32xf32, #tpu.memory_space<vmem>>, vector<4x32xf32>
    %cst_40 = arith.constant dense<0.000000e+00> : vector<32xf32>
    %47 = vector.multi_reduction <add>, %41, %cst_40 [0] : vector<8x32xf32> to vector<32xf32>
    %48 = vector.shape_cast %47 : vector<32xf32> to vector<1x32xf32>
    %cst_41 = arith.constant dense<0.000000e+00> : vector<32xf32>
    %49 = vector.multi_reduction <add>, %39, %cst_41 [0] : vector<8x32xf32> to vector<32xf32>
    %50 = vector.shape_cast %49 : vector<32xf32> to vector<1x32xf32>
    %cst_42 = arith.constant 9.99999997E-7 : f32
    %51 = vector.broadcast %cst_42 : f32 to vector<8x32xf32>
    %52 = arith.addf %39, %51 : vector<8x32xf32>
    %cst_43 = arith.constant 9.99999997E-7 : f32
    %53 = vector.broadcast %cst_43 : f32 to vector<8x32xf32>
    %54 = arith.addf %41, %53 : vector<8x32xf32>
    %cst_44 = arith.constant 9.99999997E-7 : f32
    %55 = vector.broadcast %cst_44 : f32 to vector<1x32xf32>
    %56 = arith.addf %48, %55 : vector<1x32xf32>
    %57 = vector.broadcast %56 : vector<1x32xf32> to vector<8x32xf32>
    %58 = arith.mulf %52, %57 : vector<8x32xf32>
    %cst_45 = arith.constant dense<0.000000e+00> : vector<8x4xf32>
    %59 = tpu.matmul %58, %44, %cst_45 {dimension_numbers = #tpu.dot_dimension_numbers<[1], [0], [0], [1], [0, 0, 1, 1], [], []>} : vector<8x32xf32>, vector<32x4xf32>, vector<8x4xf32> -> vector<8x4xf32>
    %cst_46 = arith.constant 1.000000e+00 : f32
    %60 = vector.broadcast %cst_46 : f32 to vector<8x4xf32>
    %61 = arith.divf %60, %59 : vector<8x4xf32>
    %cst_47 = arith.constant 9.99999997E-7 : f32
    %62 = vector.broadcast %cst_47 : f32 to vector<1x32xf32>
    %63 = arith.addf %50, %62 : vector<1x32xf32>
    %64 = vector.broadcast %63 : vector<1x32xf32> to vector<8x32xf32>
    %65 = arith.mulf %54, %64 : vector<8x32xf32>
    %cst_48 = arith.constant dense<0.000000e+00> : vector<8x4xf32>
    %66 = tpu.matmul %65, %44, %cst_48 {dimension_numbers = #tpu.dot_dimension_numbers<[1], [0], [0], [1], [0, 0, 1, 1], [], []>} : vector<8x32xf32>, vector<32x4xf32>, vector<8x4xf32> -> vector<8x4xf32>
    %cst_49 = arith.constant 1.000000e+00 : f32
    %67 = vector.broadcast %cst_49 : f32 to vector<8x4xf32>
    %68 = arith.divf %67, %66 : vector<8x4xf32>
    %cst_50 = arith.constant dense<0.000000e+00> : vector<8x32xf32>
    %69 = tpu.matmul %61, %45, %cst_50 {dimension_numbers = #tpu.dot_dimension_numbers<[1], [0], [0], [1], [0, 0, 1, 1], [], []>} : vector<8x4xf32>, vector<4x32xf32>, vector<8x32xf32> -> vector<8x32xf32>
    %cst_51 = arith.constant dense<0.000000e+00> : vector<8x32xf32>
    %70 = tpu.matmul %68, %45, %cst_51 {dimension_numbers = #tpu.dot_dimension_numbers<[1], [0], [0], [1], [0, 0, 1, 1], [], []>} : vector<8x4xf32>, vector<4x32xf32>, vector<8x32xf32> -> vector<8x32xf32>
    %71 = arith.mulf %41, %70 : vector<8x32xf32>
    %cst_52 = arith.constant dense<0.000000e+00> : vector<32xf32>
    %72 = vector.multi_reduction <add>, %71, %cst_52 [0] : vector<8x32xf32> to vector<32xf32>
    %73 = vector.shape_cast %72 : vector<32xf32> to vector<1x32xf32>
    %74 = arith.mulf %39, %69 : vector<8x32xf32>
    %cst_53 = arith.constant dense<0.000000e+00> : vector<32xf32>
    %75 = vector.multi_reduction <add>, %74, %cst_53 [0] : vector<8x32xf32> to vector<32xf32>
    %76 = vector.shape_cast %75 : vector<32xf32> to vector<1x32xf32>
    %cst_54 = arith.constant 9.99999997E-7 : f32
    %77 = vector.broadcast %cst_54 : f32 to vector<1x32xf32>
    %78 = arith.addf %73, %77 : vector<1x32xf32>
    %79 = vector.broadcast %78 : vector<1x32xf32> to vector<8x32xf32>
    %80 = arith.mulf %52, %79 : vector<8x32xf32>
    %cst_55 = arith.constant dense<0.000000e+00> : vector<8x4xf32>
    %81 = tpu.matmul %80, %44, %cst_55 {dimension_numbers = #tpu.dot_dimension_numbers<[1], [0], [0], [1], [0, 0, 1, 1], [], []>} : vector<8x32xf32>, vector<32x4xf32>, vector<8x4xf32> -> vector<8x4xf32>
    %cst_56 = arith.constant 9.99999997E-7 : f32
    %82 = vector.broadcast %cst_56 : f32 to vector<1x32xf32>
    %83 = arith.addf %76, %82 : vector<1x32xf32>
    %84 = vector.broadcast %83 : vector<1x32xf32> to vector<8x32xf32>
    %85 = arith.mulf %54, %84 : vector<8x32xf32>
    %cst_57 = arith.constant dense<0.000000e+00> : vector<8x4xf32>
    %86 = tpu.matmul %85, %44, %cst_57 {dimension_numbers = #tpu.dot_dimension_numbers<[1], [0], [0], [1], [0, 0, 1, 1], [], []>} : vector<8x32xf32>, vector<32x4xf32>, vector<8x4xf32> -> vector<8x4xf32>
    %cst_58 = arith.constant 9.99999997E-7 : f32
    %87 = vector.broadcast %cst_58 : f32 to vector<8x4xf32>
    %88 = arith.maximumf %86, %87 : vector<8x4xf32>
    %cst_59 = arith.constant 1.000000e+00 : f32
    %89 = vector.broadcast %cst_59 : f32 to vector<8x4xf32>
    %90 = arith.mulf %81, %89 : vector<8x4xf32>
    %91 = arith.negf %90 : vector<8x4xf32>
    %92 = math.exp %91 : vector<8x4xf32>
    %cst_60 = arith.constant 1.000000e+00 : f32
    %93 = vector.broadcast %cst_60 : f32 to vector<8x4xf32>
    %94 = arith.addf %93, %92 : vector<8x4xf32>
    %95 = arith.divf %93, %94 : vector<8x4xf32>
    %cst_61 = arith.constant dense<0xFF800000> : vector<4xf32>
    %96 = vector.multi_reduction <maximumf>, %88, %cst_61 [0] : vector<8x4xf32> to vector<4xf32>
    %cst_62 = arith.constant 0xFF800000 : f32
    %97 = vector.broadcast %cst_62 : f32 to vector<4xf32>
    %98 = arith.maximumf %97, %96 : vector<4xf32>
    %99 = vector.shape_cast %98 : vector<4xf32> to vector<1x4xf32>
    %100 = vector.broadcast %99 : vector<1x4xf32> to vector<8x4xf32>
    %101 = arith.subf %88, %100 : vector<8x4xf32>
    %102 = math.exp %101 : vector<8x4xf32>
    %cst_63 = arith.constant dense<0.000000e+00> : vector<4xf32>
    %103 = vector.multi_reduction <add>, %102, %cst_63 [0] : vector<8x4xf32> to vector<4xf32>
    %104 = vector.shape_cast %103 : vector<4xf32> to vector<1x4xf32>
    %105 = vector.broadcast %104 : vector<1x4xf32> to vector<8x4xf32>
    %106 = arith.divf %102, %105 : vector<8x4xf32>
    %cst_64 = arith.constant 8.000000e+00 : f32
    %107 = vector.broadcast %cst_64 : f32 to vector<8x4xf32>
    %108 = arith.mulf %106, %107 : vector<8x4xf32>
    %cst_65 = arith.constant dense<0.000000e+00> : vector<8x32xf32>
    %109 = tpu.matmul %95, %46, %cst_65 {dimension_numbers = #tpu.dot_dimension_numbers<[1], [0], [0], [1], [0, 0, 1, 1], [], []>} : vector<8x4xf32>, vector<4x32xf32>, vector<8x32xf32> -> vector<8x32xf32>
    %cst_66 = arith.constant dense<0.000000e+00> : vector<8x32xf32>
    %110 = tpu.matmul %108, %46, %cst_66 {dimension_numbers = #tpu.dot_dimension_numbers<[1], [0], [0], [1], [0, 0, 1, 1], [], []>} : vector<8x4xf32>, vector<4x32xf32>, vector<8x32xf32> -> vector<8x32xf32>
    %111 = arith.mulf %43, %110 : vector<8x32xf32>
    %112 = arith.mulf %39, %69 : vector<8x32xf32>
    %cst_67 = arith.constant 0.000000e+00 : f32
    %113 = vector.broadcast %cst_67 : f32 to vector<8x32xf32>
    %cst_68 = arith.constant dense<0.000000e+00> : vector<32x32xf32>
    %114 = tpu.matmul %41, %111, %cst_68 {dimension_numbers = #tpu.dot_dimension_numbers<[0], [0], [1], [1], [0, 1, 1, 1], [], []>} : vector<8x32xf32>, vector<8x32xf32>, vector<32x32xf32> -> vector<32x32xf32>
    %c0_69 = arith.constant 0 : index
    %c0_70 = arith.constant 0 : index
    %115 = vector.load %arg15[%c0_69, %c0_70] : memref<32x32xf32, #tpu.memory_space<vmem>>, vector<32x32xf32>
    %116 = arith.mulf %114, %115 : vector<32x32xf32>
    %cst_71 = arith.constant dense<0.000000e+00> : vector<8x32xf32>
    %117 = tpu.matmul %112, %116, %cst_71 {dimension_numbers = #tpu.dot_dimension_numbers<[1], [0], [0], [1], [0, 0, 1, 1], [], []>} : vector<8x32xf32>, vector<32x32xf32>, vector<8x32xf32> -> vector<8x32xf32>
    %118 = arith.mulf %117, %109 : vector<8x32xf32>
    %c0_72 = arith.constant 0 : index
    %c0_73 = arith.constant 0 : index
    %119 = vector.load %arg10[%c0_72, %c0_73] : memref<32x32xf32, #tpu.memory_space<vmem>>, vector<32x32xf32>
    %cst_74 = arith.constant dense<0.000000e+00> : vector<8x32xf32>
    %120 = tpu.matmul %118, %119, %cst_74 {dimension_numbers = #tpu.dot_dimension_numbers<[1], [0], [0], [1], [0, 0, 1, 1], [], []>} : vector<8x32xf32>, vector<32x32xf32>, vector<8x32xf32> -> vector<8x32xf32>
    %121 = arith.addf %113, %120 : vector<8x32xf32>
    %c0_75 = arith.constant 0 : index
    %c0_76 = arith.constant 0 : index
    %122 = vector.load %arg11[%c0_75, %c0_76] : memref<1x32xf32, #tpu.memory_space<vmem>>, vector<1x32xf32>
    %123 = vector.broadcast %122 : vector<1x32xf32> to vector<8x32xf32>
    %124 = arith.addf %121, %123 : vector<8x32xf32>
    %125 = arith.index_cast %c0_i32 : i32 to index
    %c0_77 = arith.constant 0 : index
    %c0_78 = arith.constant 0 : index
    %126 = vector.load %arg16[%125, %c0_77, %c0_78] : memref<1x8x32xf32, #tpu.memory_space<vmem>>, vector<1x8x32xf32>
    %127 = vector.shape_cast %126 : vector<1x8x32xf32> to vector<8x32xf32>
    %128 = vector.shape_cast %124 : vector<8x32xf32> to vector<1x8x32xf32>
    tpu.vector_store %arg16[%125, %c0_77, %c0_78], %128 {strides = array<i32>} : memref<1x8x32xf32, #tpu.memory_space<vmem>>, vector<1x8x32xf32>,
    %c1_i32 = arith.constant 1 : i32
    return
  }
  func.func @transform_0(%arg0: i32) -> (i32, i32, i32) {
    %c0_i32 = arith.constant 0 : i32
    %c0_i32_0 = arith.constant 0 : i32
    %c0_i32_1 = arith.constant 0 : i32
    return %arg0, %c0_i32, %c0_i32_0 : i32, i32, i32
  }
  func.func @transform_1(%arg0: i32) -> (i32, i32, i32) {
    %c0_i32 = arith.constant 0 : i32
    %c0_i32_0 = arith.constant 0 : i32
    %c0_i32_1 = arith.constant 0 : i32
    return %arg0, %c0_i32, %c0_i32_0 : i32, i32, i32
  }
  func.func @transform_2(%arg0: i32) -> (i32, i32, i32) {
    %c0_i32 = arith.constant 0 : i32
    %c0_i32_0 = arith.constant 0 : i32
    %c0_i32_1 = arith.constant 0 : i32
    return %arg0, %c0_i32, %c0_i32_0 : i32, i32, i32
  }
  func.func @transform_3(%arg0: i32) -> (i32, i32) {
    %c0_i32 = arith.constant 0 : i32
    %c0_i32_0 = arith.constant 0 : i32
    %c0_i32_1 = arith.constant 0 : i32
    return %c0_i32, %c0_i32_0 : i32, i32
  }
  func.func @transform_4(%arg0: i32) -> (i32, i32) {
    %c0_i32 = arith.constant 0 : i32
    %c0_i32_0 = arith.constant 0 : i32
    %c0_i32_1 = arith.constant 0 : i32
    return %c0_i32, %c0_i32_0 : i32, i32
  }
  func.func @transform_5(%arg0: i32) -> (i32, i32) {
    %c0_i32 = arith.constant 0 : i32
    %c0_i32_0 = arith.constant 0 : i32
    %c0_i32_1 = arith.constant 0 : i32
    return %c0_i32, %c0_i32_0 : i32, i32
  }
  func.func @transform_6(%arg0: i32) -> (i32, i32) {
    %c0_i32 = arith.constant 0 : i32
    %c0_i32_0 = arith.constant 0 : i32
    %c0_i32_1 = arith.constant 0 : i32
    return %c0_i32, %c0_i32_0 : i32, i32
  }
  func.func @transform_7(%arg0: i32) -> (i32, i32) {
    %c0_i32 = arith.constant 0 : i32
    %c0_i32_0 = arith.constant 0 : i32
    %c0_i32_1 = arith.constant 0 : i32
    return %c0_i32, %c0_i32_0 : i32, i32
  }
  func.func @transform_8(%arg0: i32) -> (i32, i32) {
    %c0_i32 = arith.constant 0 : i32
    %c0_i32_0 = arith.constant 0 : i32
    %c0_i32_1 = arith.constant 0 : i32
    return %c0_i32, %c0_i32_0 : i32, i32
  }
  func.func @transform_9(%arg0: i32) -> (i32, i32) {
    %c0_i32 = arith.constant 0 : i32
    %c0_i32_0 = arith.constant 0 : i32
    %c0_i32_1 = arith.constant 0 : i32
    return %c0_i32, %c0_i32_0 : i32, i32
  }
  func.func @transform_10(%arg0: i32) -> (i32, i32) {
    %c0_i32 = arith.constant 0 : i32
    %c0_i32_0 = arith.constant 0 : i32
    %c0_i32_1 = arith.constant 0 : i32
    return %c0_i32, %c0_i32_0 : i32, i32
  }
  func.func @transform_11(%arg0: i32) -> (i32, i32) {
    %c0_i32 = arith.constant 0 : i32
    %c0_i32_0 = arith.constant 0 : i32
    %c0_i32_1 = arith.constant 0 : i32
    return %c0_i32, %c0_i32_0 : i32, i32
  }
  func.func @transform_12(%arg0: i32) -> (i32, i32) {
    %c0_i32 = arith.constant 0 : i32
    %c0_i32_0 = arith.constant 0 : i32
    %c0_i32_1 = arith.constant 0 : i32
    return %c0_i32, %c0_i32_0 : i32, i32
  }
  func.func @transform_13(%arg0: i32) -> (i32, i32) {
    %c0_i32 = arith.constant 0 : i32
    %c0_i32_0 = arith.constant 0 : i32
    %c0_i32_1 = arith.constant 0 : i32
    return %c0_i32, %c0_i32_0 : i32, i32
  }
  func.func @transform_14(%arg0: i32) -> (i32, i32) {
    %c0_i32 = arith.constant 0 : i32
    %c0_i32_0 = arith.constant 0 : i32
    %c0_i32_1 = arith.constant 0 : i32
    return %c0_i32, %c0_i32_0 : i32, i32
  }
  func.func @transform_15(%arg0: i32) -> (i32, i32, i32) {
    %c0_i32 = arith.constant 0 : i32
    %c0_i32_0 = arith.constant 0 : i32
    %c0_i32_1 = arith.constant 0 : i32
    return %arg0, %c0_i32, %c0_i32_0 : i32, i32, i32
  }
}

</mosaic_0001>

<llo_original>
// kernel: tpu_custom_call.1
$region0: #{tpu_custom_call.1}
  #allocation0 [shape = 'u32[]', space=smem, size = 0x4, offset = 0x4, fixed_abs, tag = 'smem constant byte address 0x4 - core index']
  #allocation1 [shape = 'u32[144,128]{1,0:T(1,128)}', space=vmem, size = 0x12000, scoped, tag = 'internal scratch']
  #allocation2 [shape = 'f32[8,32]{1,0:T(8,128)}', space=vmem, size = 0x1000, scoped, tag = 'scratch operand']
  #allocation3 [shape = 'f32[8,32]{1,0:T(8,128)}', space=vmem, size = 0x1000, scoped, tag = 'scratch operand']
  #allocation4 [shape = 'f32[8,32]{1,0:T(8,128)}', space=vmem, size = 0x1000, scoped, tag = 'scratch operand']
  %s0 = inlined_call_operand.hbm [shape: f32[2,8,32], index: 0, kind: input, shape index: {}]
  %s1 = inlined_call_operand.hbm [shape: f32[2,8,32], index: 1, kind: input, shape index: {}]
  %s2 = inlined_call_operand.hbm [shape: f32[2,8,32], index: 2, kind: input, shape index: {}]
  %s3 = inlined_call_operand.vmem [shape: f32[32,32], index: 3, kind: input, shape index: {}]
  %s4 = inlined_call_operand.vmem [shape: f32[1,32], index: 4, kind: input, shape index: {}]
  %s5 = inlined_call_operand.hbm [shape: f32[32,32], index: 5, kind: input, shape index: {}]
  %s6 = inlined_call_operand.hbm [shape: f32[1,32], index: 6, kind: input, shape index: {}]
  %s7 = inlined_call_operand.hbm [shape: f32[32,32], index: 7, kind: input, shape index: {}]
  %s8 = inlined_call_operand.hbm [shape: f32[1,32], index: 8, kind: input, shape index: {}]
  %s9 = inlined_call_operand.vmem [shape: f32[32,32], index: 9, kind: input, shape index: {}]
  %s10 = inlined_call_operand.hbm [shape: f32[1,32], index: 10, kind: input, shape index: {}]
  %s11 = inlined_call_operand.vmem [shape: f32[32,4], index: 11, kind: input, shape index: {}]
  %s12 = inlined_call_operand.vmem [shape: f32[4,32], index: 12, kind: input, shape index: {}]
  %s13 = inlined_call_operand.vmem [shape: f32[4,32], index: 13, kind: input, shape index: {}]
  %s14 = inlined_call_operand.hbm [shape: f32[32,32], index: 14, kind: input, shape index: {}]
  %s15 = inlined_call_operand.hbm [shape: f32[2,8,32], index: 15, kind: output, shape index: {}]
  %s16 = sld [smem:[#allocation0]]
  $region129: #{tpu_custom_call.1} parent=0
    _
  %s18 = ssub.s32 1, %s16
  %s19 = scalar_select 0, %s18, %s16
  $region1: #{tpu_custom_call.1} parent=0
    #allocation5 [shape = 'u8[8192]{0}', space=vmem, size = 0x2000, scoped, tag = 'input window, operand 0']
    #allocation6 [shape = 's32[2]{0}', space=sflag, size = 0x8, scoped, tag = 'scoped memory for tpu_custom_call.1']
    #allocation7 [shape = 's32[2]{0}', space=sflag, size = 0x8, scoped, tag = 'scoped memory for tpu_custom_call.1']
    #allocation8 [shape = 'u8[8192]{0}', space=vmem, size = 0x2000, scoped, tag = 'input window, operand 1']
    #allocation9 [shape = 's32[2]{0}', space=sflag, size = 0x8, scoped, tag = 'scoped memory for tpu_custom_call.1']
    #allocation10 [shape = 'u8[8192]{0}', space=vmem, size = 0x2000, scoped, tag = 'input window, operand 2']
    #allocation11 [shape = 'u8[16384]{0}', space=vmem, size = 0x4000, scoped, tag = 'input window, operand 5, single buffered']
    #allocation12 [shape = 's32[1]{0}', space=sflag, size = 0x4, scoped, tag = 'scoped memory for tpu_custom_call.1']
    #allocation13 [shape = 'u8[512]{0}', space=vmem, size = 0x400, scoped, tag = 'input window, operand 6, single buffered']
    #allocation14 [shape = 'u8[16384]{0}', space=vmem, size = 0x4000, scoped, tag = 'input window, operand 7, single buffered']
    #allocation15 [shape = 's32[1]{0}', space=sflag, size = 0x4, scoped, tag = 'scoped memory for tpu_custom_call.1']
    #allocation16 [shape = 'u8[512]{0}', space=vmem, size = 0x400, scoped, tag = 'input window, operand 8, single buffered']
    #allocation17 [shape = 'u8[512]{0}', space=vmem, size = 0x400, scoped, tag = 'input window, operand 10, single buffered']
    #allocation18 [shape = 's32[1]{0}', space=sflag, size = 0x4, scoped, tag = 'scoped memory for tpu_custom_call.1']
    #allocation19 [shape = 'u8[16384]{0}', space=vmem, size = 0x4000, scoped, tag = 'input window, operand 14, single buffered']
    #allocation20 [shape = 'u8[8192]{0}', space=vmem, size = 0x2000, scoped, tag = 'output window, operand 0']
    %20 = vsyncpa [#allocation6], 0
    %s21 = scalar_lea.sflag [#allocation6], 1
    %22 = vsyncpa %s21, 0
    %23 = vsyncpa [#allocation9], 0
    %s24 = scalar_lea.sflag [#allocation9], 1
    %25 = vsyncpa %s24, 0
    %26 = vsyncpa [#allocation12], 0
    %27 = vsyncpa [#allocation15], 0
    %28 = vsyncpa [#allocation18], 0
    %29 = vsyncpa [#allocation7], 0
    %s30 = scalar_lea.sflag [#allocation7], 1
    %31 = vsyncpa %s30, 0
    loop: start=0, step=1, limit=4
    $region2: #{tpu_custom_call.1} parent=1 // loop_pre_header
      _
    $region3: #{tpu_custom_call.1} parent=1 // loop_header
      %s33 = sphi 0, %s37
      %p34 = scmp.ge.s32.totalorder %s33, 4
      %s43 = sphi 0, %s45
      %s46 = sphi 0, %s43
      %s47 = sphi 0, %s46
      %s63 = sphi 0, %s47
      %s69 = sphi 0, %s71
      %s72 = sphi 0, %s69
      %s73 = sphi 0, %s72
      %s89 = sphi 0, %s73
      %s95 = sphi 0, %s97
      %s98 = sphi 0, %s95
      %s99 = sphi 0, %s98
      %s115 = sphi 0, %s99
      %s119 = sphi 0, %s119
      %s121 = sphi 0, %s119
      %s122 = sphi 0, %s121
      %s136 = sphi 0, %s122
      %s140 = sphi 0, %s140
      %s142 = sphi 0, %s140
      %s143 = sphi 0, %s142
      %s157 = sphi 0, %s143
      %s161 = sphi 0, %s161
      %s163 = sphi 0, %s161
      %s164 = sphi 0, %s163
      %s178 = sphi 0, %s164
      %s182 = sphi 0, %s182
      %s184 = sphi 0, %s182
      %s185 = sphi 0, %s184
      %s199 = sphi 0, %s185
      %s203 = sphi 0, %s203
      %s205 = sphi 0, %s203
      %s206 = sphi 0, %s205
      %s220 = sphi 0, %s206
      %s224 = sphi 0, %s224
      %s226 = sphi 0, %s224
      %s227 = sphi 0, %s226
      %s241 = sphi 0, %s227
      %s245 = sphi 0, %s245
      %s247 = sphi 0, %s245
      %s248 = sphi 0, %s247
      %s262 = sphi 0, %s248
      %s266 = sphi 0, %s266
      %s268 = sphi 0, %s266
      %s269 = sphi 0, %s268
      %s283 = sphi 0, %s269
      %s287 = sphi 0, %s287
      %s289 = sphi 0, %s287
      %s290 = sphi 0, %s289
      %s304 = sphi 0, %s290
      %s308 = sphi 0, %s308
      %s310 = sphi 0, %s308
      %s311 = sphi 0, %s310
      %s325 = sphi 0, %s311
      %s329 = sphi 0, %s329
      %s331 = sphi 0, %s329
      %s332 = sphi 0, %s331
      %s346 = sphi 0, %s332
      %s350 = sphi 0, %s350
      %s352 = sphi 0, %s350
      %s353 = sphi 0, %s352
      %s367 = sphi 0, %s353
      %s373 = sphi 0, %s375
      %s376 = sphi 0, %s373
      %s377 = sphi 0, %s376
      %s393 = sphi 0, %s377
    $region4: #{tpu_custom_call.1} parent=1 // loop_header_branch
      %36 = sbr.rel (%p34) target = $region8
    $region5: #{tpu_custom_call.1} parent=1 // loop_body
      %s38 = ssub.s32 %s33, 1
      %s39 = ssub.s32 %s33, 2
      %s40 = sadd.s32 %s33, 1
      %s41 = ssub.s32 %s33, %s40
      %p42 = scmp.eq.s32.totalorder %s41, 0
      %s44 = sadd.s32 %s43, 1
      %s45 = scalar_select %p42, %s43, %s44
      %p48 = pneg %p42
      %p49 = scmp.eq.s32.totalorder %s33, 1
      %p50 = por %p48, %p49
      %p51 = scmp.ne.s32.totalorder %s43, %s46
      %p52 = scmp.eq.s32.totalorder %s33, 0
      %p53 = por %p51, %p52
      %p54 = scmp.ne.s32.totalorder %s43, %s46
      %p55 = scmp.eq.s32.totalorder %s38, 1
      %p56 = por %p54, %p55
      %p57 = scmp.ne.s32.totalorder %s46, %s47
      %p58 = scmp.eq.s32.totalorder %s38, 0
      %p59 = por %p57, %p58
      %p60 = scmp.ne.s32.totalorder %s46, %s47
      %p61 = scmp.eq.s32.totalorder %s39, 1
      %p62 = por %p60, %p61
      %p64 = scmp.ne.s32.totalorder %s47, %s63
      %p65 = scmp.eq.s32.totalorder %s39, 0
      %p66 = por %p64, %p65
      %s67 = ssub.s32 %s33, %s40
      %p68 = scmp.eq.s32.totalorder %s67, 0
      %s70 = sadd.s32 %s69, 1
      %s71 = scalar_select %p68, %s69, %s70
      %p74 = pneg %p68
      %p75 = scmp.eq.s32.totalorder %s33, 1
      %p76 = por %p74, %p75
      %p77 = scmp.ne.s32.totalorder %s69, %s72
      %p78 = scmp.eq.s32.totalorder %s33, 0
      %p79 = por %p77, %p78
      %p80 = scmp.ne.s32.totalorder %s69, %s72
      %p81 = scmp.eq.s32.totalorder %s38, 1
      %p82 = por %p80, %p81
      %p83 = scmp.ne.s32.totalorder %s72, %s73
      %p84 = scmp.eq.s32.totalorder %s38, 0
      %p85 = por %p83, %p84
      %p86 = scmp.ne.s32.totalorder %s72, %s73
      %p87 = scmp.eq.s32.totalorder %s39, 1
      %p88 = por %p86, %p87
      %p90 = scmp.ne.s32.totalorder %s73, %s89
      %p91 = scmp.eq.s32.totalorder %s39, 0
      %p92 = por %p90, %p91
      %s93 = ssub.s32 %s33, %s40
      %p94 = scmp.eq.s32.totalorder %s93, 0
      %s96 = sadd.s32 %s95, 1
      %s97 = scalar_select %p94, %s95, %s96
      %p100 = pneg %p94
      %p101 = scmp.eq.s32.totalorder %s33, 1
      %p102 = por %p100, %p101
      %p103 = scmp.ne.s32.totalorder %s95, %s98
      %p104 = scmp.eq.s32.totalorder %s33, 0
      %p105 = por %p103, %p104
      %p106 = scmp.ne.s32.totalorder %s95, %s98
      %p107 = scmp.eq.s32.totalorder %s38, 1
      %p108 = por %p106, %p107
      %p109 = scmp.ne.s32.totalorder %s98, %s99
      %p110 = scmp.eq.s32.totalorder %s38, 0
      %p111 = por %p109, %p110
      %p112 = scmp.ne.s32.totalorder %s98, %s99
      %p113 = scmp.eq.s32.totalorder %s39, 1
      %p114 = por %p112, %p113
      %p116 = scmp.ne.s32.totalorder %s99, %s115
      %p117 = scmp.eq.s32.totalorder %s39, 0
      %p118 = por %p116, %p117
      %s120 = sadd.s32 %s119, 1
      %p123 = scmp.eq.s32.totalorder %s33, 1
      %p124 = scmp.ne.s32.totalorder %s119, %s121
      %p125 = scmp.eq.s32.totalorder %s33, 0
      %p126 = por %p124, %p125
      %p127 = scmp.ne.s32.totalorder %s119, %s121
      %p128 = scmp.eq.s32.totalorder %s38, 1
      %p129 = por %p127, %p128
      %p130 = scmp.ne.s32.totalorder %s121, %s122
      %p131 = scmp.eq.s32.totalorder %s38, 0
      %p132 = por %p130, %p131
      %p133 = scmp.ne.s32.totalorder %s121, %s122
      %p134 = scmp.eq.s32.totalorder %s39, 1
      %p135 = por %p133, %p134
      %p137 = scmp.ne.s32.totalorder %s122, %s136
      %p138 = scmp.eq.s32.totalorder %s39, 0
      %p139 = por %p137, %p138
      %s141 = sadd.s32 %s140, 1
      %p144 = scmp.eq.s32.totalorder %s33, 1
      %p145 = scmp.ne.s32.totalorder %s140, %s142
      %p146 = scmp.eq.s32.totalorder %s33, 0
      %p147 = por %p145, %p146
      %p148 = scmp.ne.s32.totalorder %s140, %s142
      %p149 = scmp.eq.s32.totalorder %s38, 1
      %p150 = por %p148, %p149
      %p151 = scmp.ne.s32.totalorder %s142, %s143
      %p152 = scmp.eq.s32.totalorder %s38, 0
      %p153 = por %p151, %p152
      %p154 = scmp.ne.s32.totalorder %s142, %s143
      %p155 = scmp.eq.s32.totalorder %s39, 1
      %p156 = por %p154, %p155
      %p158 = scmp.ne.s32.totalorder %s143, %s157
      %p159 = scmp.eq.s32.totalorder %s39, 0
      %p160 = por %p158, %p159
      %s162 = sadd.s32 %s161, 1
      %p165 = scmp.eq.s32.totalorder %s33, 1
      %p166 = scmp.ne.s32.totalorder %s161, %s163
      %p167 = scmp.eq.s32.totalorder %s33, 0
      %p168 = por %p166, %p167
      %p169 = scmp.ne.s32.totalorder %s161, %s163
      %p170 = scmp.eq.s32.totalorder %s38, 1
      %p171 = por %p169, %p170
      %p172 = scmp.ne.s32.totalorder %s163, %s164
      %p173 = scmp.eq.s32.totalorder %s38, 0
      %p174 = por %p172, %p173
      %p175 = scmp.ne.s32.totalorder %s163, %s164
      %p176 = scmp.eq.s32.totalorder %s39, 1
      %p177 = por %p175, %p176
      %p179 = scmp.ne.s32.totalorder %s164, %s178
      %p180 = scmp.eq.s32.totalorder %s39, 0
      %p181 = por %p179, %p180
      %s183 = sadd.s32 %s182, 1
      %p186 = scmp.eq.s32.totalorder %s33, 1
      %p187 = scmp.ne.s32.totalorder %s182, %s184
      %p188 = scmp.eq.s32.totalorder %s33, 0
      %p189 = por %p187, %p188
      %p190 = scmp.ne.s32.totalorder %s182, %s184
      %p191 = scmp.eq.s32.totalorder %s38, 1
      %p192 = por %p190, %p191
      %p193 = scmp.ne.s32.totalorder %s184, %s185
      %p194 = scmp.eq.s32.totalorder %s38, 0
      %p195 = por %p193, %p194
      %p196 = scmp.ne.s32.totalorder %s184, %s185
      %p197 = scmp.eq.s32.totalorder %s39, 1
      %p198 = por %p196, %p197
      %p200 = scmp.ne.s32.totalorder %s185, %s199
      %p201 = scmp.eq.s32.totalorder %s39, 0
      %p202 = por %p200, %p201
      %s204 = sadd.s32 %s203, 1
      %p207 = scmp.eq.s32.totalorder %s33, 1
      %p208 = scmp.ne.s32.totalorder %s203, %s205
      %p209 = scmp.eq.s32.totalorder %s33, 0
      %p210 = por %p208, %p209
      %p211 = scmp.ne.s32.totalorder %s203, %s205
      %p212 = scmp.eq.s32.totalorder %s38, 1
      %p213 = por %p211, %p212
      %p214 = scmp.ne.s32.totalorder %s205, %s206
      %p215 = scmp.eq.s32.totalorder %s38, 0
      %p216 = por %p214, %p215
      %p217 = scmp.ne.s32.totalorder %s205, %s206
      %p218 = scmp.eq.s32.totalorder %s39, 1
      %p219 = por %p217, %p218
      %p221 = scmp.ne.s32.totalorder %s206, %s220
      %p222 = scmp.eq.s32.totalorder %s39, 0
      %p223 = por %p221, %p222
      %s225 = sadd.s32 %s224, 1
      %p228 = scmp.eq.s32.totalorder %s33, 1
      %p229 = scmp.ne.s32.totalorder %s224, %s226
      %p230 = scmp.eq.s32.totalorder %s33, 0
      %p231 = por %p229, %p230
      %p232 = scmp.ne.s32.totalorder %s224, %s226
      %p233 = scmp.eq.s32.totalorder %s38, 1
      %p234 = por %p232, %p233
      %p235 = scmp.ne.s32.totalorder %s226, %s227
      %p236 = scmp.eq.s32.totalorder %s38, 0
      %p237 = por %p235, %p236
      %p238 = scmp.ne.s32.totalorder %s226, %s227
      %p239 = scmp.eq.s32.totalorder %s39, 1
      %p240 = por %p238, %p239
      %p242 = scmp.ne.s32.totalorder %s227, %s241
      %p243 = scmp.eq.s32.totalorder %s39, 0
      %p244 = por %p242, %p243
      %s246 = sadd.s32 %s245, 1
      %p249 = scmp.eq.s32.totalorder %s33, 1
      %p250 = scmp.ne.s32.totalorder %s245, %s247
      %p251 = scmp.eq.s32.totalorder %s33, 0
      %p252 = por %p250, %p251
      %p253 = scmp.ne.s32.totalorder %s245, %s247
      %p254 = scmp.eq.s32.totalorder %s38, 1
      %p255 = por %p253, %p254
      %p256 = scmp.ne.s32.totalorder %s247, %s248
      %p257 = scmp.eq.s32.totalorder %s38, 0
      %p258 = por %p256, %p257
      %p259 = scmp.ne.s32.totalorder %s247, %s248
      %p260 = scmp.eq.s32.totalorder %s39, 1
      %p261 = por %p259, %p260
      %p263 = scmp.ne.s32.totalorder %s248, %s262
      %p264 = scmp.eq.s32.totalorder %s39, 0
      %p265 = por %p263, %p264
      %s267 = sadd.s32 %s266, 1
      %p270 = scmp.eq.s32.totalorder %s33, 1
      %p271 = scmp.ne.s32.totalorder %s266, %s268
      %p272 = scmp.eq.s32.totalorder %s33, 0
      %p273 = por %p271, %p272
      %p274 = scmp.ne.s32.totalorder %s266, %s268
      %p275 = scmp.eq.s32.totalorder %s38, 1
      %p276 = por %p274, %p275
      %p277 = scmp.ne.s32.totalorder %s268, %s269
      %p278 = scmp.eq.s32.totalorder %s38, 0
      %p279 = por %p277, %p278
      %p280 = scmp.ne.s32.totalorder %s268, %s269
      %p281 = scmp.eq.s32.totalorder %s39, 1
      %p282 = por %p280, %p281
      %p284 = scmp.ne.s32.totalorder %s269, %s283
      %p285 = scmp.eq.s32.totalorder %s39, 0
      %p286 = por %p284, %p285
      %s288 = sadd.s32 %s287, 1
      %p291 = scmp.eq.s32.totalorder %s33, 1
      %p292 = scmp.ne.s32.totalorder %s287, %s289
      %p293 = scmp.eq.s32.totalorder %s33, 0
      %p294 = por %p292, %p293
      %p295 = scmp.ne.s32.totalorder %s287, %s289
      %p296 = scmp.eq.s32.totalorder %s38, 1
      %p297 = por %p295, %p296
      %p298 = scmp.ne.s32.totalorder %s289, %s290
      %p299 = scmp.eq.s32.totalorder %s38, 0
      %p300 = por %p298, %p299
      %p301 = scmp.ne.s32.totalorder %s289, %s290
      %p302 = scmp.eq.s32.totalorder %s39, 1
      %p303 = por %p301, %p302
      %p305 = scmp.ne.s32.totalorder %s290, %s304
      %p306 = scmp.eq.s32.totalorder %s39, 0
      %p307 = por %p305, %p306
      %s309 = sadd.s32 %s308, 1
      %p312 = scmp.eq.s32.totalorder %s33, 1
      %p313 = scmp.ne.s32.totalorder %s308, %s310
      %p314 = scmp.eq.s32.totalorder %s33, 0
      %p315 = por %p313, %p314
      %p316 = scmp.ne.s32.totalorder %s308, %s310
      %p317 = scmp.eq.s32.totalorder %s38, 1
      %p318 = por %p316, %p317
      %p319 = scmp.ne.s32.totalorder %s310, %s311
      %p320 = scmp.eq.s32.totalorder %s38, 0
      %p321 = por %p319, %p320
      %p322 = scmp.ne.s32.totalorder %s310, %s311
      %p323 = scmp.eq.s32.totalorder %s39, 1
      %p324 = por %p322, %p323
      %p326 = scmp.ne.s32.totalorder %s311, %s325
      %p327 = scmp.eq.s32.totalorder %s39, 0
      %p328 = por %p326, %p327
      %s330 = sadd.s32 %s329, 1
      %p333 = scmp.eq.s32.totalorder %s33, 1
      %p334 = scmp.ne.s32.totalorder %s329, %s331
      %p335 = scmp.eq.s32.totalorder %s33, 0
      %p336 = por %p334, %p335
      %p337 = scmp.ne.s32.totalorder %s329, %s331
      %p338 = scmp.eq.s32.totalorder %s38, 1
      %p339 = por %p337, %p338
      %p340 = scmp.ne.s32.totalorder %s331, %s332
      %p341 = scmp.eq.s32.totalorder %s38, 0
      %p342 = por %p340, %p341
      %p343 = scmp.ne.s32.totalorder %s331, %s332
      %p344 = scmp.eq.s32.totalorder %s39, 1
      %p345 = por %p343, %p344
      %p347 = scmp.ne.s32.totalorder %s332, %s346
      %p348 = scmp.eq.s32.totalorder %s39, 0
      %p349 = por %p347, %p348
      %s351 = sadd.s32 %s350, 1
      %p354 = scmp.eq.s32.totalorder %s33, 1
      %p355 = scmp.ne.s32.totalorder %s350, %s352
      %p356 = scmp.eq.s32.totalorder %s33, 0
      %p357 = por %p355, %p356
      %p358 = scmp.ne.s32.totalorder %s350, %s352
      %p359 = scmp.eq.s32.totalorder %s38, 1
      %p360 = por %p358, %p359
      %p361 = scmp.ne.s32.totalorder %s352, %s353
      %p362 = scmp.eq.s32.totalorder %s38, 0
      %p363 = por %p361, %p362
      %p364 = scmp.ne.s32.totalorder %s352, %s353
      %p365 = scmp.eq.s32.totalorder %s39, 1
      %p366 = por %p364, %p365
      %p368 = scmp.ne.s32.totalorder %s353, %s367
      %p369 = scmp.eq.s32.totalorder %s39, 0
      %p370 = por %p368, %p369
      %s371 = ssub.s32 %s33, %s40
      %p372 = scmp.eq.s32.totalorder %s371, 0
      %s374 = sadd.s32 %s373, 1
      %s375 = scalar_select %p372, %s373, %s374
      %p378 = pneg %p372
      %p379 = scmp.eq.s32.totalorder %s33, 1
      %p380 = por %p378, %p379
      %p381 = scmp.ne.s32.totalorder %s373, %s376
      %p382 = scmp.eq.s32.totalorder %s33, 0
      %p383 = por %p381, %p382
      %p384 = scmp.ne.s32.totalorder %s373, %s376
      %p385 = scmp.eq.s32.totalorder %s38, 1
      %p386 = por %p384, %p385
      %p387 = scmp.ne.s32.totalorder %s376, %s377
      %p388 = scmp.eq.s32.totalorder %s38, 0
      %p389 = por %p387, %p388
      %p390 = scmp.ne.s32.totalorder %s376, %s377
      %p391 = scmp.eq.s32.totalorder %s39, 1
      %p392 = por %p390, %p391
      %p394 = scmp.ne.s32.totalorder %s377, %s393
      %p395 = scmp.eq.s32.totalorder %s39, 0
      %p396 = por %p394, %p395
      %p397 = scmp.le.s32.totalorder 1, %s33
      %p398 = scmp.lt.s32.totalorder %s33, 3
      %p399 = pnand %p397, %p398
      %p400 = pneg %p399
      // Predicated region
      $region9: #{tpu_custom_call.1} parent=5 // pred_check
        _
      $region10: #{tpu_custom_call.1} parent=5 // pred_check_branch
        %402 = sbr.rel (%p399) target = $region12
      $region11: #{tpu_custom_call.1} parent=5 // pred_region
        %s403 = ssub.s32 %s33, 1
        // Predicated region
        $region13: #{tpu_custom_call.1} parent=11 // pred_check
          %p404 = pneg %p132
        $region14: #{tpu_custom_call.1} parent=11 // pred_check_branch
          %406 = sbr.rel (%p404) target = $region16
        $region15: #{tpu_custom_call.1} parent=11 // pred_region
          _
        $region16: #{tpu_custom_call.1} parent=11 // pred_fallthru
          _
        // Predicated region
        $region17: #{tpu_custom_call.1} parent=11 // pred_check
          %p407 = pneg %p153
        $region18: #{tpu_custom_call.1} parent=11 // pred_check_branch
          %409 = sbr.rel (%p407) target = $region20
        $region19: #{tpu_custom_call.1} parent=11 // pred_region
          _
        $region20: #{tpu_custom_call.1} parent=11 // pred_fallthru
          _
        // Predicated region
        $region21: #{tpu_custom_call.1} parent=11 // pred_check
          %p410 = pneg %p174
        $region22: #{tpu_custom_call.1} parent=11 // pred_check_branch
          %412 = sbr.rel (%p410) target = $region24
        $region23: #{tpu_custom_call.1} parent=11 // pred_region
          %s414 = ssub.s32 512, 512
          %415 = vsyncadd [#allocation12], %s414
          %s416 = sshll.u32 [#allocation11], 4
          %s417 = int_to_ptr.vmem [resolvable:$true] %s416
          %422 = dma.hbm_to_vmem [thread:$0]  %s5, 512, %s417, [#allocation12], 128, 128, 8
        $region24: #{tpu_custom_call.1} parent=11 // pred_fallthru
          _
        // Predicated region
        $region25: #{tpu_custom_call.1} parent=11 // pred_check
          %p423 = pneg %p195
        $region26: #{tpu_custom_call.1} parent=11 // pred_check_branch
          %425 = sbr.rel (%p423) target = $region28
        $region27: #{tpu_custom_call.1} parent=11 // pred_region
          %s427 = ssub.s32 16, 16
          %428 = vsyncadd [#allocation12], %s427
          %s430 = sshll.u32 [#allocation13], 4
          %s431 = int_to_ptr.vmem [resolvable:$true] %s430
          %433 = dma.hbm_to_vmem [thread:$0]  %s6, 16, %s431, [#allocation12]
        $region28: #{tpu_custom_call.1} parent=11 // pred_fallthru
          _
        // Predicated region
        $region29: #{tpu_custom_call.1} parent=11 // pred_check
          %p434 = pneg %p216
        $region30: #{tpu_custom_call.1} parent=11 // pred_check_branch
          %436 = sbr.rel (%p434) target = $region32
        $region31: #{tpu_custom_call.1} parent=11 // pred_region
          %s438 = ssub.s32 512, 512
          %439 = vsyncadd [#allocation15], %s438
          %s440 = sshll.u32 [#allocation14], 4
          %s441 = int_to_ptr.vmem [resolvable:$true] %s440
          %446 = dma.hbm_to_vmem [thread:$0]  %s7, 512, %s441, [#allocation15], 128, 128, 8
        $region32: #{tpu_custom_call.1} parent=11 // pred_fallthru
          _
        // Predicated region
        $region33: #{tpu_custom_call.1} parent=11 // pred_check
          %p447 = pneg %p237
        $region34: #{tpu_custom_call.1} parent=11 // pred_check_branch
          %449 = sbr.rel (%p447) target = $region36
        $region35: #{tpu_custom_call.1} parent=11 // pred_region
          %s451 = ssub.s32 16, 16
          %452 = vsyncadd [#allocation15], %s451
          %s454 = sshll.u32 [#allocation16], 4
          %s455 = int_to_ptr.vmem [resolvable:$true] %s454
          %457 = dma.hbm_to_vmem [thread:$0]  %s8, 16, %s455, [#allocation15]
        $region36: #{tpu_custom_call.1} parent=11 // pred_fallthru
          _
        // Predicated region
        $region37: #{tpu_custom_call.1} parent=11 // pred_check
          %p458 = pneg %p258
        $region38: #{tpu_custom_call.1} parent=11 // pred_check_branch
          %460 = sbr.rel (%p458) target = $region40
        $region39: #{tpu_custom_call.1} parent=11 // pred_region
          _
        $region40: #{tpu_custom_call.1} parent=11 // pred_fallthru
          _
        // Predicated region
        $region41: #{tpu_custom_call.1} parent=11 // pred_check
          %p461 = pneg %p279
        $region42: #{tpu_custom_call.1} parent=11 // pred_check_branch
          %463 = sbr.rel (%p461) target = $region44
        $region43: #{tpu_custom_call.1} parent=11 // pred_region
          %s465 = ssub.s32 16, 16
          %466 = vsyncadd [#allocation18], %s465
          %s468 = sshll.u32 [#allocation17], 4
          %s469 = int_to_ptr.vmem [resolvable:$true] %s468
          %471 = dma.hbm_to_vmem [thread:$0]  %s10, 16, %s469, [#allocation18]
        $region44: #{tpu_custom_call.1} parent=11 // pred_fallthru
          _
        // Predicated region
        $region45: #{tpu_custom_call.1} parent=11 // pred_check
          %p472 = pneg %p300
        $region46: #{tpu_custom_call.1} parent=11 // pred_check_branch
          %474 = sbr.rel (%p472) target = $region48
        $region47: #{tpu_custom_call.1} parent=11 // pred_region
          _
        $region48: #{tpu_custom_call.1} parent=11 // pred_fallthru
          _
        // Predicated region
        $region49: #{tpu_custom_call.1} parent=11 // pred_check
          %p475 = pneg %p321
        $region50: #{tpu_custom_call.1} parent=11 // pred_check_branch
          %477 = sbr.rel (%p475) target = $region52
        $region51: #{tpu_custom_call.1} parent=11 // pred_region
          _
        $region52: #{tpu_custom_call.1} parent=11 // pred_fallthru
          _
        // Predicated region
        $region53: #{tpu_custom_call.1} parent=11 // pred_check
          %p478 = pneg %p342
        $region54: #{tpu_custom_call.1} parent=11 // pred_check_branch
          %480 = sbr.rel (%p478) target = $region56
        $region55: #{tpu_custom_call.1} parent=11 // pred_region
          _
        $region56: #{tpu_custom_call.1} parent=11 // pred_fallthru
          _
        // Predicated region
        $region57: #{tpu_custom_call.1} parent=11 // pred_check
          %p481 = pneg %p363
        $region58: #{tpu_custom_call.1} parent=11 // pred_check_branch
          %483 = sbr.rel (%p481) target = $region60
        $region59: #{tpu_custom_call.1} parent=11 // pred_region
          %s485 = ssub.s32 512, 512
          %486 = vsyncadd [#allocation18], %s485
          %s487 = sshll.u32 [#allocation19], 4
          %s488 = int_to_ptr.vmem [resolvable:$true] %s487
          %493 = dma.hbm_to_vmem [thread:$0]  %s14, 512, %s488, [#allocation18], 128, 128, 8
        $region60: #{tpu_custom_call.1} parent=11 // pred_fallthru
          _
      $region12: #{tpu_custom_call.1} parent=5 // pred_fallthru
        _
      %p494 = scmp.lt.s32.totalorder %s33, 2
      // Predicated region
      $region61: #{tpu_custom_call.1} parent=5 // pred_check
        %p495 = pneg %p494
      $region62: #{tpu_custom_call.1} parent=5 // pred_check_branch
        %497 = sbr.rel (%p495) target = $region64
      $region63: #{tpu_custom_call.1} parent=5 // pred_region
        // Predicated region
        $region65: #{tpu_custom_call.1} parent=63 // pred_check
          %p498 = pneg %p53
        $region66: #{tpu_custom_call.1} parent=63 // pred_check_branch
          %500 = sbr.rel (%p498) target = $region68
        $region67: #{tpu_custom_call.1} parent=63 // pred_region
          %s501 = sand.u32 %s43, 1
          %s502 = scalar_lea.sflag [#allocation6], %s501
          %s503 = sand.u32 %s43, 1
          %s504 = smul.addr %s503, 8
          %s505 = scalar_lea.vmem [#allocation5], %s504
          %s507 = ssub.s32 128, 128
          %508 = vsyncadd %s502, %s507
          %s509 = smul.addr %s33, 128
          %s510 = scalar_lea.hbm %s0, %s509
          %s512 = sshll.u32 %s505, 4
          %s513 = int_to_ptr.vmem [resolvable:$true] %s512
          %515 = dma.hbm_to_vmem [thread:$0]  %s510, 128, %s513, %s502
        $region68: #{tpu_custom_call.1} parent=63 // pred_fallthru
          _
        // Predicated region
        $region69: #{tpu_custom_call.1} parent=63 // pred_check
          %p516 = pneg %p79
        $region70: #{tpu_custom_call.1} parent=63 // pred_check_branch
          %518 = sbr.rel (%p516) target = $region72
        $region71: #{tpu_custom_call.1} parent=63 // pred_region
          %s519 = sand.u32 %s33, 1
          %s520 = scalar_lea.sflag [#allocation9], %s519
          %s521 = sand.u32 %s69, 1
          %s522 = smul.addr %s521, 8
          %s523 = scalar_lea.vmem [#allocation8], %s522
          %s525 = ssub.s32 128, 128
          %526 = vsyncadd %s520, %s525
          %s527 = smul.addr %s33, 128
          %s528 = scalar_lea.hbm %s1, %s527
          %s530 = sshll.u32 %s523, 4
          %s531 = int_to_ptr.vmem [resolvable:$true] %s530
          %533 = dma.hbm_to_vmem [thread:$0]  %s528, 128, %s531, %s520
        $region72: #{tpu_custom_call.1} parent=63 // pred_fallthru
          _
        // Predicated region
        $region73: #{tpu_custom_call.1} parent=63 // pred_check
          %p534 = pneg %p105
        $region74: #{tpu_custom_call.1} parent=63 // pred_check_branch
          %536 = sbr.rel (%p534) target = $region76
        $region75: #{tpu_custom_call.1} parent=63 // pred_region
          %s537 = sand.u32 %s33, 1
          %s538 = scalar_lea.sflag [#allocation9], %s537
          %s539 = sand.u32 %s95, 1
          %s540 = smul.addr %s539, 8
          %s541 = scalar_lea.vmem [#allocation10], %s540
          %s543 = ssub.s32 128, 128
          %544 = vsyncadd %s538, %s543
          %s545 = smul.addr %s33, 128
          %s546 = scalar_lea.hbm %s2, %s545
          %s548 = sshll.u32 %s541, 4
          %s549 = int_to_ptr.vmem [resolvable:$true] %s548
          %551 = dma.hbm_to_vmem [thread:$0]  %s546, 128, %s549, %s538
        $region76: #{tpu_custom_call.1} parent=63 // pred_fallthru
          _
      $region64: #{tpu_custom_call.1} parent=5 // pred_fallthru
        _
      %p552 = scmp.le.s32.totalorder 1, %s33
      %p553 = scmp.lt.s32.totalorder %s33, 3
      %p554 = pnand %p552, %p553
      %p555 = pneg %p554
      // Predicated region
      $region77: #{tpu_custom_call.1} parent=5 // pred_check
        _
      $region78: #{tpu_custom_call.1} parent=5 // pred_check_branch
        %557 = sbr.rel (%p554) target = $region80
      $region79: #{tpu_custom_call.1} parent=5 // pred_region
        %s558 = ssub.s32 %s33, 1
        %s559 = sand.u32 %s46, 1
        %s560 = scalar_lea.sflag [#allocation6], %s559
        %s561 = sand.u32 %s46, 1
        %s562 = smul.addr %s561, 8
        %s563 = scalar_lea.vmem [#allocation5], %s562
        // Predicated region
        $region81: #{tpu_custom_call.1} parent=79 // pred_check
          %p564 = pneg %p59
        $region82: #{tpu_custom_call.1} parent=79 // pred_check_branch
          %566 = sbr.rel (%p564) target = $region84
        $region83: #{tpu_custom_call.1} parent=79 // pred_region
          %567 = dma.done %s560, 128
        $region84: #{tpu_custom_call.1} parent=79 // pred_fallthru
          _
        %s568 = sand.u32 %s38, 1
        %s569 = scalar_lea.sflag [#allocation9], %s568
        %s570 = sand.u32 %s72, 1
        %s571 = smul.addr %s570, 8
        %s572 = scalar_lea.vmem [#allocation8], %s571
        // Predicated region
        $region85: #{tpu_custom_call.1} parent=79 // pred_check
          %p573 = pneg %p85
        $region86: #{tpu_custom_call.1} parent=79 // pred_check_branch
          %575 = sbr.rel (%p573) target = $region88
        $region87: #{tpu_custom_call.1} parent=79 // pred_region
          %576 = dma.done %s569, 128
        $region88: #{tpu_custom_call.1} parent=79 // pred_fallthru
          _
        %s577 = sand.u32 %s38, 1
        %s578 = scalar_lea.sflag [#allocation9], %s577
        %s579 = sand.u32 %s98, 1
        %s580 = smul.addr %s579, 8
        %s581 = scalar_lea.vmem [#allocation10], %s580
        // Predicated region
        $region89: #{tpu_custom_call.1} parent=79 // pred_check
          %p582 = pneg %p111
        $region90: #{tpu_custom_call.1} parent=79 // pred_check_branch
          %584 = sbr.rel (%p582) target = $region92
        $region91: #{tpu_custom_call.1} parent=79 // pred_region
          %585 = dma.done %s578, 128
        $region92: #{tpu_custom_call.1} parent=79 // pred_fallthru
          _
        // Predicated region
        $region93: #{tpu_custom_call.1} parent=79 // pred_check
          %p586 = pneg %p174
        $region94: #{tpu_custom_call.1} parent=79 // pred_check_branch
          %588 = sbr.rel (%p586) target = $region96
        $region95: #{tpu_custom_call.1} parent=79 // pred_region
          %589 = dma.done [#allocation12], 512
        $region96: #{tpu_custom_call.1} parent=79 // pred_fallthru
          _
        // Predicated region
        $region97: #{tpu_custom_call.1} parent=79 // pred_check
          %p590 = pneg %p195
        $region98: #{tpu_custom_call.1} parent=79 // pred_check_branch
          %592 = sbr.rel (%p590) target = $region100
        $region99: #{tpu_custom_call.1} parent=79 // pred_region
          %593 = dma.done [#allocation12], 16
        $region100: #{tpu_custom_call.1} parent=79 // pred_fallthru
          _
        // Predicated region
        $region101: #{tpu_custom_call.1} parent=79 // pred_check
          %p594 = pneg %p216
        $region102: #{tpu_custom_call.1} parent=79 // pred_check_branch
          %596 = sbr.rel (%p594) target = $region104
        $region103: #{tpu_custom_call.1} parent=79 // pred_region
          %597 = dma.done [#allocation15], 512
        $region104: #{tpu_custom_call.1} parent=79 // pred_fallthru
          _
        // Predicated region
        $region105: #{tpu_custom_call.1} parent=79 // pred_check
          %p598 = pneg %p237
        $region106: #{tpu_custom_call.1} parent=79 // pred_check_branch
          %600 = sbr.rel (%p598) target = $region108
        $region107: #{tpu_custom_call.1} parent=79 // pred_region
          %601 = dma.done [#allocation15], 16
        $region108: #{tpu_custom_call.1} parent=79 // pred_fallthru
          _
        // Predicated region
        $region109: #{tpu_custom_call.1} parent=79 // pred_check
          %p602 = pneg %p279
        $region110: #{tpu_custom_call.1} parent=79 // pred_check_branch
          %604 = sbr.rel (%p602) target = $region112
        $region111: #{tpu_custom_call.1} parent=79 // pred_region
          %605 = dma.done [#allocation18], 16
        $region112: #{tpu_custom_call.1} parent=79 // pred_fallthru
          _
        // Predicated region
        $region113: #{tpu_custom_call.1} parent=79 // pred_check
          %p606 = pneg %p363
        $region114: #{tpu_custom_call.1} parent=79 // pred_check_branch
          %608 = sbr.rel (%p606) target = $region116
        $region115: #{tpu_custom_call.1} parent=79 // pred_region
          %609 = dma.done [#allocation18], 512
        $region116: #{tpu_custom_call.1} parent=79 // pred_fallthru
          _
        %s610 = sand.u32 %s46, 1
        %s611 = scalar_lea.sflag [#allocation6], %s610
        %s612 = sand.u32 %s46, 1
        %s613 = smul.addr %s612, 8
        %s614 = scalar_lea.vmem [#allocation5], %s613
        %p615 = pneg %p59
        %p616 = pneg %p56
        %s617 = sand.u32 %s38, 1
        %s618 = scalar_lea.sflag [#allocation9], %s617
        %s619 = sand.u32 %s72, 1
        %s620 = smul.addr %s619, 8
        %s621 = scalar_lea.vmem [#allocation8], %s620
        %p622 = pneg %p85
        %p623 = pneg %p82
        %s624 = sand.u32 %s38, 1
        %s625 = scalar_lea.sflag [#allocation9], %s624
        %s626 = sand.u32 %s98, 1
        %s627 = smul.addr %s626, 8
        %s628 = scalar_lea.vmem [#allocation10], %s627
        %p629 = pneg %p111
        %p630 = pneg %p108
        %p631 = pneg %p132
        %p632 = pneg %p129
        %p633 = pneg %p153
        %p634 = pneg %p150
        %p635 = pneg %p174
        %p636 = pneg %p171
        %p637 = pneg %p195
        %p638 = pneg %p192
        %p639 = pneg %p216
        %p640 = pneg %p213
        %p641 = pneg %p237
        %p642 = pneg %p234
        %p643 = pneg %p258
        %p644 = pneg %p255
        %p645 = pneg %p279
        %p646 = pneg %p276
        %p647 = pneg %p300
        %p648 = pneg %p297
        %p649 = pneg %p321
        %p650 = pneg %p318
        %p651 = pneg %p342
        %p652 = pneg %p339
        %p653 = pneg %p363
        %p654 = pneg %p360
        %p655 = pneg %p389
        %p656 = pneg %p386
        %s657 = sand.u32 %s376, 1
        %s658 = scalar_lea.sflag [#allocation7], %s657
        %s659 = sand.u32 %s376, 1
        %s660 = smul.addr %s659, 8
        %s661 = scalar_lea.vmem [#allocation20], %s660
        %v662 = vld [vmem:[%s563] sm:$0xff]
        %v663 = vld [vmem:[%s572] sm:$0xff]
        %v664 = vld [vmem:[%s581] sm:$0xff]
        %v665 = vld [vmem:[%s3] sm:$0xff]
        %v666 = vld [vmem:[%s3 + $0x8] sm:$0xff]
        %v667 = vld [vmem:[%s3 + $0x10] sm:$0xff]
        %v668 = vld [vmem:[%s3 + $0x18] sm:$0xff]
        %v669 = vld [vmem:[%s4] sm:$0x1]
        %v671 = vlaneseq
        %v672 = vshrl.u32 %v671, 7
        %v673 = vsub.s32 0, %v672
        %v674 = vrot.slane %v669, %v673
        %vm676 = vcmask 261120
        %v678 = vsel %vm676, %v662, 0
        %680 = vmatprep.subr.mxu0 0.0
        %681 = vmatpush1.msra.mxu0 %v665
        %682 = vmatprep.subr.mxu0 0.0
        %683 = vmatpush1.msra.mxu0 %v666
        %684 = vmatprep.subr.mxu0 0.0
        %685 = vmatpush1.msra.mxu0 %v667
        %686 = vmatprep.subr.mxu0 0.0
        %687 = vmatpush1.msra.mxu0 %v668
        %688 = vmatprep.subr.mxu0 0.0
        %689 = vmatpush1.msra.mxu0 0.0
        %690 = vmatprep.subr.mxu0 0.0
        %691 = vmatpush1.msra.mxu0 0.0
        %692 = vmatprep.subr.mxu0 0.0
        %693 = vmatpush1.msra.mxu0 0.0
        %694 = vmatprep.subr.mxu0 0.0
        %695 = vmatpush1.msra.mxu0 0.0
        %696 = vmatprep.subr.mxu0 0.0
        %697 = vmatpush1.msra.mxu0 0.0
        %698 = vmatprep.subr.mxu0 0.0
        %699 = vmatpush1.msra.mxu0 0.0
        %700 = vmatprep.subr.mxu0 0.0
        %701 = vmatpush1.msra.mxu0 0.0
        %702 = vmatprep.subr.mxu0 0.0
        %703 = vmatpush1.msra.mxu0 0.0
        %704 = vmatprep.subr.mxu0 0.0
        %705 = vmatpush1.msra.mxu0 0.0
        %706 = vmatprep.subr.mxu0 0.0
        %707 = vmatpush1.msra.mxu0 0.0
        %708 = vmatprep.subr.mxu0 0.0
        %709 = vmatpush1.msra.mxu0 0.0
        %710 = vmatprep.subr.mxu0 0.0
        %711 = vmatpush1.msra.mxu0 0.0
        %712 = vmatprep.subr.mxu0 0.0
        %713 = vmatpush1.msra.mxu0 0.0
        %714 = vmatprep.subr.mxu0 0.0
        %715 = vmatpush1.msra.mxu0 0.0
        %716 = vmatprep.subr.mxu0 0.0
        %717 = vmatpush1.msra.mxu0 0.0
        %718 = vmatprep.subr.mxu0 0.0
        %719 = vmatpush1.msra.mxu0 0.0
        %720 = vmatprep.subr.mxu0 0.0
        %721 = vmatpush1.msra.mxu0 0.0
        %722 = vmatprep.subr.mxu0 0.0
        %723 = vmatpush1.msra.mxu0 0.0
        %724 = vmatprep.subr.mxu0 0.0
        %725 = vmatpush1.msra.mxu0 0.0
        %726 = vmatprep.subr.mxu0 0.0
        %727 = vmatpush1.msra.mxu0 0.0
        %728 = vmatprep.subr.mxu0 0.0
        %729 = vmatpush1.msra.mxu0 0.0
        %730 = vmatprep.subr.mxu0 0.0
        %731 = vmatpush1.msra.mxu0 0.0
        %732 = vmatprep.subr.mxu0 0.0
        %733 = vmatpush1.msra.mxu0 0.0
        %734 = vmatprep.subr.mxu0 0.0
        %735 = vmatpush1.msra.mxu0 0.0
        %736 = vmatprep.subr.mxu0 0.0
        %737 = vmatpush1.msra.mxu0 0.0
        %738 = vmatprep.subr.mxu0 0.0
        %739 = vmatpush1.msra.mxu0 0.0
        %740 = vmatprep.subr.mxu0 0.0
        %741 = vmatpush1.msra.mxu0 0.0
        %742 = vmatprep.subr.mxu0 0.0
        %743 = vmatpush1.msra.mxu0 0.0
        %744 = vmatprep.mubr.f32.mxu0 0.0
        %745 = vmatmul.mubr.f32.gmra.mrb[0].mxu0 %v678
        %v746 = vpop.f32.mrb[0].mxu0
        %v747 = vadd.f32 %v674, %v746
        %v748 = vpop.f32.mrb[0].mxu0
        %749 = vdwg.mxu0
        %v750 = vxor.u32 %v747, 2147483648
        %v751 = vmul.f32 %v750, 1.442695
        %v752 = vpow.pop %v751
        %v753 = vadd.f32 %v752, 1.0
        %v754 = vrcp.pop %v753
        %v755 = vmul.f32 1.0, %v754
        %756 = vst.msk [vmem:[#allocation2] sm:$0xff] %vm676, %v755
        %v757 = vld [vmem:[#allocation11] sm:$0xff]
        %v758 = vld [vmem:[#allocation11 + $0x8] sm:$0xff]
        %v759 = vld [vmem:[#allocation11 + $0x10] sm:$0xff]
        %v760 = vld [vmem:[#allocation11 + $0x18] sm:$0xff]
        %v761 = vld [vmem:[#allocation13] sm:$0x1]
        %v763 = vlaneseq
        %v764 = vshrl.u32 %v763, 7
        %v765 = vsub.s32 0, %v764
        %v766 = vrot.slane %v761, %v765
        %v769 = vsel %vm676, %v663, 0
        %771 = vmatprep.subr.mxu0 0.0
        %772 = vmatpush1.msra.mxu0 %v757
        %773 = vmatprep.subr.mxu0 0.0
        %774 = vmatpush1.msra.mxu0 %v758
        %775 = vmatprep.subr.mxu0 0.0
        %776 = vmatpush1.msra.mxu0 %v759
        %777 = vmatprep.subr.mxu0 0.0
        %778 = vmatpush1.msra.mxu0 %v760
        %779 = vmatprep.subr.mxu0 0.0
        %780 = vmatpush1.msra.mxu0 0.0
        %781 = vmatprep.subr.mxu0 0.0
        %782 = vmatpush1.msra.mxu0 0.0
        %783 = vmatprep.subr.mxu0 0.0
        %784 = vmatpush1.msra.mxu0 0.0
        %785 = vmatprep.subr.mxu0 0.0
        %786 = vmatpush1.msra.mxu0 0.0
        %787 = vmatprep.subr.mxu0 0.0
        %788 = vmatpush1.msra.mxu0 0.0
        %789 = vmatprep.subr.mxu0 0.0
        %790 = vmatpush1.msra.mxu0 0.0
        %791 = vmatprep.subr.mxu0 0.0
        %792 = vmatpush1.msra.mxu0 0.0
        %793 = vmatprep.subr.mxu0 0.0
        %794 = vmatpush1.msra.mxu0 0.0
        %795 = vmatprep.subr.mxu0 0.0
        %796 = vmatpush1.msra.mxu0 0.0
        %797 = vmatprep.subr.mxu0 0.0
        %798 = vmatpush1.msra.mxu0 0.0
        %799 = vmatprep.subr.mxu0 0.0
        %800 = vmatpush1.msra.mxu0 0.0
        %801 = vmatprep.subr.mxu0 0.0
        %802 = vmatpush1.msra.mxu0 0.0
        %803 = vmatprep.subr.mxu0 0.0
        %804 = vmatpush1.msra.mxu0 0.0
        %805 = vmatprep.subr.mxu0 0.0
        %806 = vmatpush1.msra.mxu0 0.0
        %807 = vmatprep.subr.mxu0 0.0
        %808 = vmatpush1.msra.mxu0 0.0
        %809 = vmatprep.subr.mxu0 0.0
        %810 = vmatpush1.msra.mxu0 0.0
        %811 = vmatprep.subr.mxu0 0.0
        %812 = vmatpush1.msra.mxu0 0.0
        %813 = vmatprep.subr.mxu0 0.0
        %814 = vmatpush1.msra.mxu0 0.0
        %815 = vmatprep.subr.mxu0 0.0
        %816 = vmatpush1.msra.mxu0 0.0
        %817 = vmatprep.subr.mxu0 0.0
        %818 = vmatpush1.msra.mxu0 0.0
        %819 = vmatprep.subr.mxu0 0.0
        %820 = vmatpush1.msra.mxu0 0.0
        %821 = vmatprep.subr.mxu0 0.0
        %822 = vmatpush1.msra.mxu0 0.0
        %823 = vmatprep.subr.mxu0 0.0
        %824 = vmatpush1.msra.mxu0 0.0
        %825 = vmatprep.subr.mxu0 0.0
        %826 = vmatpush1.msra.mxu0 0.0
        %827 = vmatprep.subr.mxu0 0.0
        %828 = vmatpush1.msra.mxu0 0.0
        %829 = vmatprep.subr.mxu0 0.0
        %830 = vmatpush1.msra.mxu0 0.0
        %831 = vmatprep.subr.mxu0 0.0
        %832 = vmatpush1.msra.mxu0 0.0
        %833 = vmatprep.subr.mxu0 0.0
        %834 = vmatpush1.msra.mxu0 0.0
        %835 = vmatprep.mubr.f32.mxu0 0.0
        %836 = vmatmul.mubr.f32.gmra.mrb[0].mxu0 %v769
        %v837 = vpop.f32.mrb[0].mxu0
        %v838 = vadd.f32 %v766, %v837
        %v839 = vpop.f32.mrb[0].mxu0
        %840 = vdwg.mxu0
        %v841 = vxor.u32 %v838, 2147483648
        %v842 = vmul.f32 %v841, 1.442695
        %v843 = vpow.pop %v842
        %v844 = vadd.f32 %v843, 1.0
        %v845 = vrcp.pop %v844
        %v846 = vmul.f32 1.0, %v845
        %847 = vst.msk [vmem:[#allocation3] sm:$0xff] %vm676, %v846
        %v848 = vld [vmem:[#allocation14] sm:$0xff]
        %v849 = vld [vmem:[#allocation14 + $0x8] sm:$0xff]
        %v850 = vld [vmem:[#allocation14 + $0x10] sm:$0xff]
        %v851 = vld [vmem:[#allocation14 + $0x18] sm:$0xff]
        %v852 = vld [vmem:[#allocation16] sm:$0x1]
        %v854 = vlaneseq
        %v855 = vshrl.u32 %v854, 7
        %v856 = vsub.s32 0, %v855
        %v857 = vrot.slane %v852, %v856
        %v860 = vsel %vm676, %v664, 0
        %862 = vmatprep.subr.mxu0 0.0
        %863 = vmatpush1.msra.mxu0 %v848
        %864 = vmatprep.subr.mxu0 0.0
        %865 = vmatpush1.msra.mxu0 %v849
        %866 = vmatprep.subr.mxu0 0.0
        %867 = vmatpush1.msra.mxu0 %v850
        %868 = vmatprep.subr.mxu0 0.0
        %869 = vmatpush1.msra.mxu0 %v851
        %870 = vmatprep.subr.mxu0 0.0
        %871 = vmatpush1.msra.mxu0 0.0
        %872 = vmatprep.subr.mxu0 0.0
        %873 = vmatpush1.msra.mxu0 0.0
        %874 = vmatprep.subr.mxu0 0.0
        %875 = vmatpush1.msra.mxu0 0.0
        %876 = vmatprep.subr.mxu0 0.0
        %877 = vmatpush1.msra.mxu0 0.0
        %878 = vmatprep.subr.mxu0 0.0
        %879 = vmatpush1.msra.mxu0 0.0
        %880 = vmatprep.subr.mxu0 0.0
        %881 = vmatpush1.msra.mxu0 0.0
        %882 = vmatprep.subr.mxu0 0.0
        %883 = vmatpush1.msra.mxu0 0.0
        %884 = vmatprep.subr.mxu0 0.0
        %885 = vmatpush1.msra.mxu0 0.0
        %886 = vmatprep.subr.mxu0 0.0
        %887 = vmatpush1.msra.mxu0 0.0
        %888 = vmatprep.subr.mxu0 0.0
        %889 = vmatpush1.msra.mxu0 0.0
        %890 = vmatprep.subr.mxu0 0.0
        %891 = vmatpush1.msra.mxu0 0.0
        %892 = vmatprep.subr.mxu0 0.0
        %893 = vmatpush1.msra.mxu0 0.0
        %894 = vmatprep.subr.mxu0 0.0
        %895 = vmatpush1.msra.mxu0 0.0
        %896 = vmatprep.subr.mxu0 0.0
        %897 = vmatpush1.msra.mxu0 0.0
        %898 = vmatprep.subr.mxu0 0.0
        %899 = vmatpush1.msra.mxu0 0.0
        %900 = vmatprep.subr.mxu0 0.0
        %901 = vmatpush1.msra.mxu0 0.0
        %902 = vmatprep.subr.mxu0 0.0
        %903 = vmatpush1.msra.mxu0 0.0
        %904 = vmatprep.subr.mxu0 0.0
        %905 = vmatpush1.msra.mxu0 0.0
        %906 = vmatprep.subr.mxu0 0.0
        %907 = vmatpush1.msra.mxu0 0.0
        %908 = vmatprep.subr.mxu0 0.0
        %909 = vmatpush1.msra.mxu0 0.0
        %910 = vmatprep.subr.mxu0 0.0
        %911 = vmatpush1.msra.mxu0 0.0
        %912 = vmatprep.subr.mxu0 0.0
        %913 = vmatpush1.msra.mxu0 0.0
        %914 = vmatprep.subr.mxu0 0.0
        %915 = vmatpush1.msra.mxu0 0.0
        %916 = vmatprep.subr.mxu0 0.0
        %917 = vmatpush1.msra.mxu0 0.0
        %918 = vmatprep.subr.mxu0 0.0
        %919 = vmatpush1.msra.mxu0 0.0
        %920 = vmatprep.subr.mxu0 0.0
        %921 = vmatpush1.msra.mxu0 0.0
        %922 = vmatprep.subr.mxu0 0.0
        %923 = vmatpush1.msra.mxu0 0.0
        %924 = vmatprep.subr.mxu0 0.0
        %925 = vmatpush1.msra.mxu0 0.0
        %926 = vmatprep.mubr.f32.mxu0 0.0
        %927 = vmatmul.mubr.f32.gmra.mrb[0].mxu0 %v860
        %v928 = vpop.f32.mrb[0].mxu0
        %v929 = vadd.f32 %v857, %v928
        %v930 = vpop.f32.mrb[0].mxu0
        %931 = vdwg.mxu0
        %932 = vst.msk [vmem:[#allocation4] sm:$0xff] %vm676, %v929
        %v933 = vld [vmem:[#allocation2] sm:$0xff]
        %v934 = vld [vmem:[#allocation3] sm:$0xff]
        %v935 = vld [vmem:[#allocation4] sm:$0xff]
        %v936 = vld [vmem:[%s11] sm:$0xff]
        %v937 = vld [vmem:[%s11 + $0x8] sm:$0xff]
        %v938 = vld [vmem:[%s11 + $0x10] sm:$0xff]
        %v939 = vld [vmem:[%s11 + $0x18] sm:$0xff]
        %v940 = vld [vmem:[%s12] sm:$0xf]
        %v941 = vld [vmem:[%s13] sm:$0xf]
        %v942 = vsel %vm676, %v934, 0.0
        %v943 = vrot.slane %v942, 4
        %v944 = vadd.f32 %v942, %v943
        %v945 = vrot.slane %v944, 2
        %v946 = vadd.f32 %v944, %v945
        %v947 = vrot.slane %v946, 1
        %v948 = vadd.f32 %v946, %v947
        %v949 = vsel %vm676, %v933, 0.0
        %v950 = vrot.slane %v949, 4
        %v951 = vadd.f32 %v949, %v950
        %v952 = vrot.slane %v951, 2
        %v953 = vadd.f32 %v951, %v952
        %v954 = vrot.slane %v953, 1
        %v955 = vadd.f32 %v953, %v954
        %v956 = vadd.f32 %v933, 1e-06
        %v957 = vadd.f32 %v934, 1e-06
        %v958 = vadd.f32 %v948, 1e-06
        %v959 = vmul.f32 %v956, %v958
        %v961 = vsel %vm676, %v959, 0
        %963 = vmatprep.subr.mxu0 0.0
        %964 = vmatpush1.msra.mxu0 %v936
        %965 = vmatprep.subr.mxu0 0.0
        %966 = vmatpush1.msra.mxu0 %v937
        %967 = vmatprep.subr.mxu0 0.0
        %968 = vmatpush1.msra.mxu0 %v938
        %969 = vmatprep.subr.mxu0 0.0
        %970 = vmatpush1.msra.mxu0 %v939
        %971 = vmatprep.subr.mxu0 0.0
        %972 = vmatpush1.msra.mxu0 0.0
        %973 = vmatprep.subr.mxu0 0.0
        %974 = vmatpush1.msra.mxu0 0.0
        %975 = vmatprep.subr.mxu0 0.0
        %976 = vmatpush1.msra.mxu0 0.0
        %977 = vmatprep.subr.mxu0 0.0
        %978 = vmatpush1.msra.mxu0 0.0
        %979 = vmatprep.subr.mxu0 0.0
        %980 = vmatpush1.msra.mxu0 0.0
        %981 = vmatprep.subr.mxu0 0.0
        %982 = vmatpush1.msra.mxu0 0.0
        %983 = vmatprep.subr.mxu0 0.0
        %984 = vmatpush1.msra.mxu0 0.0
        %985 = vmatprep.subr.mxu0 0.0
        %986 = vmatpush1.msra.mxu0 0.0
        %987 = vmatprep.subr.mxu0 0.0
        %988 = vmatpush1.msra.mxu0 0.0
        %989 = vmatprep.subr.mxu0 0.0
        %990 = vmatpush1.msra.mxu0 0.0
        %991 = vmatprep.subr.mxu0 0.0
        %992 = vmatpush1.msra.mxu0 0.0
        %993 = vmatprep.subr.mxu0 0.0
        %994 = vmatpush1.msra.mxu0 0.0
        %995 = vmatprep.subr.mxu0 0.0
        %996 = vmatpush1.msra.mxu0 0.0
        %997 = vmatprep.subr.mxu0 0.0
        %998 = vmatpush1.msra.mxu0 0.0
        %999 = vmatprep.subr.mxu0 0.0
        %1000 = vmatpush1.msra.mxu0 0.0
        %1001 = vmatprep.subr.mxu0 0.0
        %1002 = vmatpush1.msra.mxu0 0.0
        %1003 = vmatprep.subr.mxu0 0.0
        %1004 = vmatpush1.msra.mxu0 0.0
        %1005 = vmatprep.subr.mxu0 0.0
        %1006 = vmatpush1.msra.mxu0 0.0
        %1007 = vmatprep.subr.mxu0 0.0
        %1008 = vmatpush1.msra.mxu0 0.0
        %1009 = vmatprep.subr.mxu0 0.0
        %1010 = vmatpush1.msra.mxu0 0.0
        %1011 = vmatprep.subr.mxu0 0.0
        %1012 = vmatpush1.msra.mxu0 0.0
        %1013 = vmatprep.subr.mxu0 0.0
        %1014 = vmatpush1.msra.mxu0 0.0
        %1015 = vmatprep.subr.mxu0 0.0
        %1016 = vmatpush1.msra.mxu0 0.0
        %1017 = vmatprep.subr.mxu0 0.0
        %1018 = vmatpush1.msra.mxu0 0.0
        %1019 = vmatprep.subr.mxu0 0.0
        %1020 = vmatpush1.msra.mxu0 0.0
        %1021 = vmatprep.subr.mxu0 0.0
        %1022 = vmatpush1.msra.mxu0 0.0
        %1023 = vmatprep.subr.mxu0 0.0
        %1024 = vmatpush1.msra.mxu0 0.0
        %1025 = vmatprep.subr.mxu0 0.0
        %1026 = vmatpush1.msra.mxu0 0.0
        %1027 = vmatprep.mubr.f32.mxu0 0.0
        %1028 = vmatmul.mubr.f32.gmra.mrb[0].mxu0 %v961
        %v1029 = vpop.f32.mrb[0].mxu0
        %v1030 = vadd.f32 0.0, %v1029
        %v1031 = vpop.f32.mrb[0].mxu0
        %1032 = vdwg.mxu0
        %v1033 = vrcp.pop %v1030
        %v1034 = vmul.f32 1.0, %v1033
        %v1035 = vadd.f32 %v955, 1e-06
        %v1036 = vmul.f32 %v957, %v1035
        %v1038 = vsel %vm676, %v1036, 0
        %1040 = vmatprep.subr.mxu0 0.0
        %1041 = vmatpush1.msra.mxu0 %v936
        %1042 = vmatprep.subr.mxu0 0.0
        %1043 = vmatpush1.msra.mxu0 %v937
        %1044 = vmatprep.subr.mxu0 0.0
        %1045 = vmatpush1.msra.mxu0 %v938
        %1046 = vmatprep.subr.mxu0 0.0
        %1047 = vmatpush1.msra.mxu0 %v939
        %1048 = vmatprep.subr.mxu0 0.0
        %1049 = vmatpush1.msra.mxu0 0.0
        %1050 = vmatprep.subr.mxu0 0.0
        %1051 = vmatpush1.msra.mxu0 0.0
        %1052 = vmatprep.subr.mxu0 0.0
        %1053 = vmatpush1.msra.mxu0 0.0
        %1054 = vmatprep.subr.mxu0 0.0
        %1055 = vmatpush1.msra.mxu0 0.0
        %1056 = vmatprep.subr.mxu0 0.0
        %1057 = vmatpush1.msra.mxu0 0.0
        %1058 = vmatprep.subr.mxu0 0.0
        %1059 = vmatpush1.msra.mxu0 0.0
        %1060 = vmatprep.subr.mxu0 0.0
        %1061 = vmatpush1.msra.mxu0 0.0
        %1062 = vmatprep.subr.mxu0 0.0
        %1063 = vmatpush1.msra.mxu0 0.0
        %1064 = vmatprep.subr.mxu0 0.0
        %1065 = vmatpush1.msra.mxu0 0.0
        %1066 = vmatprep.subr.mxu0 0.0
        %1067 = vmatpush1.msra.mxu0 0.0
        %1068 = vmatprep.subr.mxu0 0.0
        %1069 = vmatpush1.msra.mxu0 0.0
        %1070 = vmatprep.subr.mxu0 0.0
        %1071 = vmatpush1.msra.mxu0 0.0
        %1072 = vmatprep.subr.mxu0 0.0
        %1073 = vmatpush1.msra.mxu0 0.0
        %1074 = vmatprep.subr.mxu0 0.0
        %1075 = vmatpush1.msra.mxu0 0.0
        %1076 = vmatprep.subr.mxu0 0.0
        %1077 = vmatpush1.msra.mxu0 0.0
        %1078 = vmatprep.subr.mxu0 0.0
        %1079 = vmatpush1.msra.mxu0 0.0
        %1080 = vmatprep.subr.mxu0 0.0
        %1081 = vmatpush1.msra.mxu0 0.0
        %1082 = vmatprep.subr.mxu0 0.0
        %1083 = vmatpush1.msra.mxu0 0.0
        %1084 = vmatprep.subr.mxu0 0.0
        %1085 = vmatpush1.msra.mxu0 0.0
        %1086 = vmatprep.subr.mxu0 0.0
        %1087 = vmatpush1.msra.mxu0 0.0
        %1088 = vmatprep.subr.mxu0 0.0
        %1089 = vmatpush1.msra.mxu0 0.0
        %1090 = vmatprep.subr.mxu0 0.0
        %1091 = vmatpush1.msra.mxu0 0.0
        %1092 = vmatprep.subr.mxu0 0.0
        %1093 = vmatpush1.msra.mxu0 0.0
        %1094 = vmatprep.subr.mxu0 0.0
        %1095 = vmatpush1.msra.mxu0 0.0
        %1096 = vmatprep.subr.mxu0 0.0
        %1097 = vmatpush1.msra.mxu0 0.0
        %1098 = vmatprep.subr.mxu0 0.0
        %1099 = vmatpush1.msra.mxu0 0.0
        %1100 = vmatprep.subr.mxu0 0.0
        %1101 = vmatpush1.msra.mxu0 0.0
        %1102 = vmatprep.subr.mxu0 0.0
        %1103 = vmatpush1.msra.mxu0 0.0
        %1104 = vmatprep.mubr.f32.mxu0 0.0
        %1105 = vmatmul.mubr.f32.gmra.mrb[0].mxu0 %v1038
        %v1106 = vpop.f32.mrb[0].mxu0
        %v1107 = vadd.f32 0.0, %v1106
        %v1108 = vpop.f32.mrb[0].mxu0
        %1109 = vdwg.mxu0
        %v1110 = vrcp.pop %v1107
        %v1111 = vmul.f32 1.0, %v1110
        %vm1112 = vcmask 31744
        %v1114 = vsel %vm1112, %v1034, 0
        %vm1116 = vcmask 1043456
        %v1118 = vsel %vm1116, %v940, 0
        %1120 = vmatprep.subr.mxu0 0.0
        %1121 = vmatpush1.msra.mxu0 %v1118
        %1122 = vmatprep.subr.mxu0 0.0
        %1123 = vmatpush1.msra.mxu0 0.0
        %1124 = vmatprep.subr.mxu0 0.0
        %1125 = vmatpush1.msra.mxu0 0.0
        %1126 = vmatprep.subr.mxu0 0.0
        %1127 = vmatpush1.msra.mxu0 0.0
        %1128 = vmatprep.subr.mxu0 0.0
        %1129 = vmatpush1.msra.mxu0 0.0
        %1130 = vmatprep.subr.mxu0 0.0
        %1131 = vmatpush1.msra.mxu0 0.0
        %1132 = vmatprep.subr.mxu0 0.0
        %1133 = vmatpush1.msra.mxu0 0.0
        %1134 = vmatprep.subr.mxu0 0.0
        %1135 = vmatpush1.msra.mxu0 0.0
        %1136 = vmatprep.subr.mxu0 0.0
        %1137 = vmatpush1.msra.mxu0 0.0
        %1138 = vmatprep.subr.mxu0 0.0
        %1139 = vmatpush1.msra.mxu0 0.0
        %1140 = vmatprep.subr.mxu0 0.0
        %1141 = vmatpush1.msra.mxu0 0.0
        %1142 = vmatprep.subr.mxu0 0.0
        %1143 = vmatpush1.msra.mxu0 0.0
        %1144 = vmatprep.subr.mxu0 0.0
        %1145 = vmatpush1.msra.mxu0 0.0
        %1146 = vmatprep.subr.mxu0 0.0
        %1147 = vmatpush1.msra.mxu0 0.0
        %1148 = vmatprep.subr.mxu0 0.0
        %1149 = vmatpush1.msra.mxu0 0.0
        %1150 = vmatprep.subr.mxu0 0.0
        %1151 = vmatpush1.msra.mxu0 0.0
        %1152 = vmatprep.subr.mxu0 0.0
        %1153 = vmatpush1.msra.mxu0 0.0
        %1154 = vmatprep.subr.mxu0 0.0
        %1155 = vmatpush1.msra.mxu0 0.0
        %1156 = vmatprep.subr.mxu0 0.0
        %1157 = vmatpush1.msra.mxu0 0.0
        %1158 = vmatprep.subr.mxu0 0.0
        %1159 = vmatpush1.msra.mxu0 0.0
        %1160 = vmatprep.subr.mxu0 0.0
        %1161 = vmatpush1.msra.mxu0 0.0
        %1162 = vmatprep.subr.mxu0 0.0
        %1163 = vmatpush1.msra.mxu0 0.0
        %1164 = vmatprep.subr.mxu0 0.0
        %1165 = vmatpush1.msra.mxu0 0.0
        %1166 = vmatprep.subr.mxu0 0.0
        %1167 = vmatpush1.msra.mxu0 0.0
        %1168 = vmatprep.subr.mxu0 0.0
        %1169 = vmatpush1.msra.mxu0 0.0
        %1170 = vmatprep.subr.mxu0 0.0
        %1171 = vmatpush1.msra.mxu0 0.0
        %1172 = vmatprep.subr.mxu0 0.0
        %1173 = vmatpush1.msra.mxu0 0.0
        %1174 = vmatprep.subr.mxu0 0.0
        %1175 = vmatpush1.msra.mxu0 0.0
        %1176 = vmatprep.subr.mxu0 0.0
        %1177 = vmatpush1.msra.mxu0 0.0
        %1178 = vmatprep.subr.mxu0 0.0
        %1179 = vmatpush1.msra.mxu0 0.0
        %1180 = vmatprep.subr.mxu0 0.0
        %1181 = vmatpush1.msra.mxu0 0.0
        %1182 = vmatprep.subr.mxu0 0.0
        %1183 = vmatpush1.msra.mxu0 0.0
        %1184 = vmatprep.mubr.f32.mxu0 0.0
        %1185 = vmatmul.mubr.f32.gmra.mrb[0].mxu0 %v1114
        %v1186 = vpop.f32.mrb[0].mxu0
        %v1187 = vadd.f32 0.0, %v1186
        %v1188 = vpop.f32.mrb[0].mxu0
        %1189 = vdwg.mxu0
        %v1191 = vsel %vm1112, %v1111, 0
        %1193 = vmatprep.subr.mxu0 0.0
        %1194 = vmatpush1.msra.mxu0 %v1118
        %1195 = vmatprep.subr.mxu0 0.0
        %1196 = vmatpush1.msra.mxu0 0.0
        %1197 = vmatprep.subr.mxu0 0.0
        %1198 = vmatpush1.msra.mxu0 0.0
        %1199 = vmatprep.subr.mxu0 0.0
        %1200 = vmatpush1.msra.mxu0 0.0
        %1201 = vmatprep.subr.mxu0 0.0
        %1202 = vmatpush1.msra.mxu0 0.0
        %1203 = vmatprep.subr.mxu0 0.0
        %1204 = vmatpush1.msra.mxu0 0.0
        %1205 = vmatprep.subr.mxu0 0.0
        %1206 = vmatpush1.msra.mxu0 0.0
        %1207 = vmatprep.subr.mxu0 0.0
        %1208 = vmatpush1.msra.mxu0 0.0
        %1209 = vmatprep.subr.mxu0 0.0
        %1210 = vmatpush1.msra.mxu0 0.0
        %1211 = vmatprep.subr.mxu0 0.0
        %1212 = vmatpush1.msra.mxu0 0.0
        %1213 = vmatprep.subr.mxu0 0.0
        %1214 = vmatpush1.msra.mxu0 0.0
        %1215 = vmatprep.subr.mxu0 0.0
        %1216 = vmatpush1.msra.mxu0 0.0
        %1217 = vmatprep.subr.mxu0 0.0
        %1218 = vmatpush1.msra.mxu0 0.0
        %1219 = vmatprep.subr.mxu0 0.0
        %1220 = vmatpush1.msra.mxu0 0.0
        %1221 = vmatprep.subr.mxu0 0.0
        %1222 = vmatpush1.msra.mxu0 0.0
        %1223 = vmatprep.subr.mxu0 0.0
        %1224 = vmatpush1.msra.mxu0 0.0
        %1225 = vmatprep.subr.mxu0 0.0
        %1226 = vmatpush1.msra.mxu0 0.0
        %1227 = vmatprep.subr.mxu0 0.0
        %1228 = vmatpush1.msra.mxu0 0.0
        %1229 = vmatprep.subr.mxu0 0.0
        %1230 = vmatpush1.msra.mxu0 0.0
        %1231 = vmatprep.subr.mxu0 0.0
        %1232 = vmatpush1.msra.mxu0 0.0
        %1233 = vmatprep.subr.mxu0 0.0
        %1234 = vmatpush1.msra.mxu0 0.0
        %1235 = vmatprep.subr.mxu0 0.0
        %1236 = vmatpush1.msra.mxu0 0.0
        %1237 = vmatprep.subr.mxu0 0.0
        %1238 = vmatpush1.msra.mxu0 0.0
        %1239 = vmatprep.subr.mxu0 0.0
        %1240 = vmatpush1.msra.mxu0 0.0
        %1241 = vmatprep.subr.mxu0 0.0
        %1242 = vmatpush1.msra.mxu0 0.0
        %1243 = vmatprep.subr.mxu0 0.0
        %1244 = vmatpush1.msra.mxu0 0.0
        %1245 = vmatprep.subr.mxu0 0.0
        %1246 = vmatpush1.msra.mxu0 0.0
        %1247 = vmatprep.subr.mxu0 0.0
        %1248 = vmatpush1.msra.mxu0 0.0
        %1249 = vmatprep.subr.mxu0 0.0
        %1250 = vmatpush1.msra.mxu0 0.0
        %1251 = vmatprep.subr.mxu0 0.0
        %1252 = vmatpush1.msra.mxu0 0.0
        %1253 = vmatprep.subr.mxu0 0.0
        %1254 = vmatpush1.msra.mxu0 0.0
        %1255 = vmatprep.subr.mxu0 0.0
        %1256 = vmatpush1.msra.mxu0 0.0
        %1257 = vmatprep.mubr.f32.mxu0 0.0
        %1258 = vmatmul.mubr.f32.gmra.mrb[0].mxu0 %v1191
        %v1259 = vpop.f32.mrb[0].mxu0
        %v1260 = vadd.f32 0.0, %v1259
        %v1261 = vpop.f32.mrb[0].mxu0
        %1262 = vdwg.mxu0
        %v1263 = vmul.f32 %v934, %v1260
        %v1264 = vsel %vm676, %v1263, 0.0
        %v1265 = vrot.slane %v1264, 4
        %v1266 = vadd.f32 %v1264, %v1265
        %v1267 = vrot.slane %v1266, 2
        %v1268 = vadd.f32 %v1266, %v1267
        %v1269 = vrot.slane %v1268, 1
        %v1270 = vadd.f32 %v1268, %v1269
        %v1271 = vmul.f32 %v933, %v1187
        %v1272 = vsel %vm676, %v1271, 0.0
        %v1273 = vrot.slane %v1272, 4
        %v1274 = vadd.f32 %v1272, %v1273
        %v1275 = vrot.slane %v1274, 2
        %v1276 = vadd.f32 %v1274, %v1275
        %v1277 = vrot.slane %v1276, 1
        %v1278 = vadd.f32 %v1276, %v1277
        %v1279 = vadd.f32 %v1270, 1e-06
        %v1280 = vmul.f32 %v956, %v1279
        %v1282 = vsel %vm676, %v1280, 0
        %1284 = vmatprep.subr.mxu0 0.0
        %1285 = vmatpush1.msra.mxu0 %v936
        %1286 = vmatprep.subr.mxu0 0.0
        %1287 = vmatpush1.msra.mxu0 %v937
        %1288 = vmatprep.subr.mxu0 0.0
        %1289 = vmatpush1.msra.mxu0 %v938
        %1290 = vmatprep.subr.mxu0 0.0
        %1291 = vmatpush1.msra.mxu0 %v939
        %1292 = vmatprep.subr.mxu0 0.0
        %1293 = vmatpush1.msra.mxu0 0.0
        %1294 = vmatprep.subr.mxu0 0.0
        %1295 = vmatpush1.msra.mxu0 0.0
        %1296 = vmatprep.subr.mxu0 0.0
        %1297 = vmatpush1.msra.mxu0 0.0
        %1298 = vmatprep.subr.mxu0 0.0
        %1299 = vmatpush1.msra.mxu0 0.0
        %1300 = vmatprep.subr.mxu0 0.0
        %1301 = vmatpush1.msra.mxu0 0.0
        %1302 = vmatprep.subr.mxu0 0.0
        %1303 = vmatpush1.msra.mxu0 0.0
        %1304 = vmatprep.subr.mxu0 0.0
        %1305 = vmatpush1.msra.mxu0 0.0
        %1306 = vmatprep.subr.mxu0 0.0
        %1307 = vmatpush1.msra.mxu0 0.0
        %1308 = vmatprep.subr.mxu0 0.0
        %1309 = vmatpush1.msra.mxu0 0.0
        %1310 = vmatprep.subr.mxu0 0.0
        %1311 = vmatpush1.msra.mxu0 0.0
        %1312 = vmatprep.subr.mxu0 0.0
        %1313 = vmatpush1.msra.mxu0 0.0
        %1314 = vmatprep.subr.mxu0 0.0
        %1315 = vmatpush1.msra.mxu0 0.0
        %1316 = vmatprep.subr.mxu0 0.0
        %1317 = vmatpush1.msra.mxu0 0.0
        %1318 = vmatprep.subr.mxu0 0.0
        %1319 = vmatpush1.msra.mxu0 0.0
        %1320 = vmatprep.subr.mxu0 0.0
        %1321 = vmatpush1.msra.mxu0 0.0
        %1322 = vmatprep.subr.mxu0 0.0
        %1323 = vmatpush1.msra.mxu0 0.0
        %1324 = vmatprep.subr.mxu0 0.0
        %1325 = vmatpush1.msra.mxu0 0.0
        %1326 = vmatprep.subr.mxu0 0.0
        %1327 = vmatpush1.msra.mxu0 0.0
        %1328 = vmatprep.subr.mxu0 0.0
        %1329 = vmatpush1.msra.mxu0 0.0
        %1330 = vmatprep.subr.mxu0 0.0
        %1331 = vmatpush1.msra.mxu0 0.0
        %1332 = vmatprep.subr.mxu0 0.0
        %1333 = vmatpush1.msra.mxu0 0.0
        %1334 = vmatprep.subr.mxu0 0.0
        %1335 = vmatpush1.msra.mxu0 0.0
        %1336 = vmatprep.subr.mxu0 0.0
        %1337 = vmatpush1.msra.mxu0 0.0
        %1338 = vmatprep.subr.mxu0 0.0
        %1339 = vmatpush1.msra.mxu0 0.0
        %1340 = vmatprep.subr.mxu0 0.0
        %1341 = vmatpush1.msra.mxu0 0.0
        %1342 = vmatprep.subr.mxu0 0.0
        %1343 = vmatpush1.msra.mxu0 0.0
        %1344 = vmatprep.subr.mxu0 0.0
        %1345 = vmatpush1.msra.mxu0 0.0
        %1346 = vmatprep.subr.mxu0 0.0
        %1347 = vmatpush1.msra.mxu0 0.0
        %1348 = vmatprep.mubr.f32.mxu0 0.0
        %1349 = vmatmul.mubr.f32.gmra.mrb[0].mxu0 %v1282
        %v1350 = vpop.f32.mrb[0].mxu0
        %v1351 = vadd.f32 0.0, %v1350
        %v1352 = vpop.f32.mrb[0].mxu0
        %1353 = vdwg.mxu0
        %v1354 = vadd.f32 %v1278, 1e-06
        %v1355 = vmul.f32 %v957, %v1354
        %v1357 = vsel %vm676, %v1355, 0
        %1359 = vmatprep.subr.mxu0 0.0
        %1360 = vmatpush1.msra.mxu0 %v936
        %1361 = vmatprep.subr.mxu0 0.0
        %1362 = vmatpush1.msra.mxu0 %v937
        %1363 = vmatprep.subr.mxu0 0.0
        %1364 = vmatpush1.msra.mxu0 %v938
        %1365 = vmatprep.subr.mxu0 0.0
        %1366 = vmatpush1.msra.mxu0 %v939
        %1367 = vmatprep.subr.mxu0 0.0
        %1368 = vmatpush1.msra.mxu0 0.0
        %1369 = vmatprep.subr.mxu0 0.0
        %1370 = vmatpush1.msra.mxu0 0.0
        %1371 = vmatprep.subr.mxu0 0.0
        %1372 = vmatpush1.msra.mxu0 0.0
        %1373 = vmatprep.subr.mxu0 0.0
        %1374 = vmatpush1.msra.mxu0 0.0
        %1375 = vmatprep.subr.mxu0 0.0
        %1376 = vmatpush1.msra.mxu0 0.0
        %1377 = vmatprep.subr.mxu0 0.0
        %1378 = vmatpush1.msra.mxu0 0.0
        %1379 = vmatprep.subr.mxu0 0.0
        %1380 = vmatpush1.msra.mxu0 0.0
        %1381 = vmatprep.subr.mxu0 0.0
        %1382 = vmatpush1.msra.mxu0 0.0
        %1383 = vmatprep.subr.mxu0 0.0
        %1384 = vmatpush1.msra.mxu0 0.0
        %1385 = vmatprep.subr.mxu0 0.0
        %1386 = vmatpush1.msra.mxu0 0.0
        %1387 = vmatprep.subr.mxu0 0.0
        %1388 = vmatpush1.msra.mxu0 0.0
        %1389 = vmatprep.subr.mxu0 0.0
        %1390 = vmatpush1.msra.mxu0 0.0
        %1391 = vmatprep.subr.mxu0 0.0
        %1392 = vmatpush1.msra.mxu0 0.0
        %1393 = vmatprep.subr.mxu0 0.0
        %1394 = vmatpush1.msra.mxu0 0.0
        %1395 = vmatprep.subr.mxu0 0.0
        %1396 = vmatpush1.msra.mxu0 0.0
        %1397 = vmatprep.subr.mxu0 0.0
        %1398 = vmatpush1.msra.mxu0 0.0
        %1399 = vmatprep.subr.mxu0 0.0
        %1400 = vmatpush1.msra.mxu0 0.0
        %1401 = vmatprep.subr.mxu0 0.0
        %1402 = vmatpush1.msra.mxu0 0.0
        %1403 = vmatprep.subr.mxu0 0.0
        %1404 = vmatpush1.msra.mxu0 0.0
        %1405 = vmatprep.subr.mxu0 0.0
        %1406 = vmatpush1.msra.mxu0 0.0
        %1407 = vmatprep.subr.mxu0 0.0
        %1408 = vmatpush1.msra.mxu0 0.0
        %1409 = vmatprep.subr.mxu0 0.0
        %1410 = vmatpush1.msra.mxu0 0.0
        %1411 = vmatprep.subr.mxu0 0.0
        %1412 = vmatpush1.msra.mxu0 0.0
        %1413 = vmatprep.subr.mxu0 0.0
        %1414 = vmatpush1.msra.mxu0 0.0
        %1415 = vmatprep.subr.mxu0 0.0
        %1416 = vmatpush1.msra.mxu0 0.0
        %1417 = vmatprep.subr.mxu0 0.0
        %1418 = vmatpush1.msra.mxu0 0.0
        %1419 = vmatprep.subr.mxu0 0.0
        %1420 = vmatpush1.msra.mxu0 0.0
        %1421 = vmatprep.subr.mxu0 0.0
        %1422 = vmatpush1.msra.mxu0 0.0
        %1423 = vmatprep.mubr.f32.mxu0 0.0
        %1424 = vmatmul.mubr.f32.gmra.mrb[0].mxu0 %v1357
        %v1425 = vpop.f32.mrb[0].mxu0
        %v1426 = vadd.f32 0.0, %v1425
        %v1427 = vpop.f32.mrb[0].mxu0
        %1428 = vdwg.mxu0
        %v1429 = vmax.f32 %v1426, 1e-06
        %v1430 = vxor.u32 %v1351, 2147483648
        %v1431 = vmul.f32 %v1430, 1.442695
        %v1432 = vpow.pop %v1431
        %v1433 = vadd.f32 %v1432, 1.0
        %v1434 = vrcp.pop %v1433
        %v1435 = vmul.f32 1.0, %v1434
        %v1436 = vsel %vm1112, %v1429, -inf
        %v1437 = vrot.slane %v1436, 4
        %v1438 = vmax.f32 %v1436, %v1437
        %v1439 = vrot.slane %v1438, 2
        %v1440 = vmax.f32 %v1438, %v1439
        %v1441 = vrot.slane %v1440, 1
        %v1442 = vmax.f32 %v1440, %v1441
        %v1443 = vsub.f32 %v1429, %v1442
        %v1444 = vmul.f32 %v1443, 1.442695
        %v1445 = vpow.pop %v1444
        %v1446 = vsel %vm1112, %v1445, 0.0
        %v1447 = vrot.slane %v1446, 4
        %v1448 = vadd.f32 %v1446, %v1447
        %v1449 = vrot.slane %v1448, 2
        %v1450 = vadd.f32 %v1448, %v1449
        %v1451 = vrot.slane %v1450, 1
        %v1452 = vadd.f32 %v1450, %v1451
        %v1453 = vrcp.pop %v1452
        %v1454 = vmul.f32 %v1445, %v1453
        %v1455 = vmul.f32 %v1454, 8.0
        %v1457 = vsel %vm1112, %v1435, 0
        %v1460 = vsel %vm1116, %v941, 0
        %1462 = vmatprep.subr.mxu0 0.0
        %1463 = vmatpush1.msra.mxu0 %v1460
        %1464 = vmatprep.subr.mxu0 0.0
        %1465 = vmatpush1.msra.mxu0 0.0
        %1466 = vmatprep.subr.mxu0 0.0
        %1467 = vmatpush1.msra.mxu0 0.0
        %1468 = vmatprep.subr.mxu0 0.0
        %1469 = vmatpush1.msra.mxu0 0.0
        %1470 = vmatprep.subr.mxu0 0.0
        %1471 = vmatpush1.msra.mxu0 0.0
        %1472 = vmatprep.subr.mxu0 0.0
        %1473 = vmatpush1.msra.mxu0 0.0
        %1474 = vmatprep.subr.mxu0 0.0
        %1475 = vmatpush1.msra.mxu0 0.0
        %1476 = vmatprep.subr.mxu0 0.0
        %1477 = vmatpush1.msra.mxu0 0.0
        %1478 = vmatprep.subr.mxu0 0.0
        %1479 = vmatpush1.msra.mxu0 0.0
        %1480 = vmatprep.subr.mxu0 0.0
        %1481 = vmatpush1.msra.mxu0 0.0
        %1482 = vmatprep.subr.mxu0 0.0
        %1483 = vmatpush1.msra.mxu0 0.0
        %1484 = vmatprep.subr.mxu0 0.0
        %1485 = vmatpush1.msra.mxu0 0.0
        %1486 = vmatprep.subr.mxu0 0.0
        %1487 = vmatpush1.msra.mxu0 0.0
        %1488 = vmatprep.subr.mxu0 0.0
        %1489 = vmatpush1.msra.mxu0 0.0
        %1490 = vmatprep.subr.mxu0 0.0
        %1491 = vmatpush1.msra.mxu0 0.0
        %1492 = vmatprep.subr.mxu0 0.0
        %1493 = vmatpush1.msra.mxu0 0.0
        %1494 = vmatprep.subr.mxu0 0.0
        %1495 = vmatpush1.msra.mxu0 0.0
        %1496 = vmatprep.subr.mxu0 0.0
        %1497 = vmatpush1.msra.mxu0 0.0
        %1498 = vmatprep.subr.mxu0 0.0
        %1499 = vmatpush1.msra.mxu0 0.0
        %1500 = vmatprep.subr.mxu0 0.0
        %1501 = vmatpush1.msra.mxu0 0.0
        %1502 = vmatprep.subr.mxu0 0.0
        %1503 = vmatpush1.msra.mxu0 0.0
        %1504 = vmatprep.subr.mxu0 0.0
        %1505 = vmatpush1.msra.mxu0 0.0
        %1506 = vmatprep.subr.mxu0 0.0
        %1507 = vmatpush1.msra.mxu0 0.0
        %1508 = vmatprep.subr.mxu0 0.0
        %1509 = vmatpush1.msra.mxu0 0.0
        %1510 = vmatprep.subr.mxu0 0.0
        %1511 = vmatpush1.msra.mxu0 0.0
        %1512 = vmatprep.subr.mxu0 0.0
        %1513 = vmatpush1.msra.mxu0 0.0
        %1514 = vmatprep.subr.mxu0 0.0
        %1515 = vmatpush1.msra.mxu0 0.0
        %1516 = vmatprep.subr.mxu0 0.0
        %1517 = vmatpush1.msra.mxu0 0.0
        %1518 = vmatprep.subr.mxu0 0.0
        %1519 = vmatpush1.msra.mxu0 0.0
        %1520 = vmatprep.subr.mxu0 0.0
        %1521 = vmatpush1.msra.mxu0 0.0
        %1522 = vmatprep.subr.mxu0 0.0
        %1523 = vmatpush1.msra.mxu0 0.0
        %1524 = vmatprep.subr.mxu0 0.0
        %1525 = vmatpush1.msra.mxu0 0.0
        %1526 = vmatprep.mubr.f32.mxu0 0.0
        %1527 = vmatmul.mubr.f32.gmra.mrb[0].mxu0 %v1457
        %v1528 = vpop.f32.mrb[0].mxu0
        %v1529 = vadd.f32 0.0, %v1528
        %v1530 = vpop.f32.mrb[0].mxu0
        %1531 = vdwg.mxu0
        %v1533 = vsel %vm1112, %v1455, 0
        %1535 = vmatprep.subr.mxu0 0.0
        %1536 = vmatpush1.msra.mxu0 %v1460
        %1537 = vmatprep.subr.mxu0 0.0
        %1538 = vmatpush1.msra.mxu0 0.0
        %1539 = vmatprep.subr.mxu0 0.0
        %1540 = vmatpush1.msra.mxu0 0.0
        %1541 = vmatprep.subr.mxu0 0.0
        %1542 = vmatpush1.msra.mxu0 0.0
        %1543 = vmatprep.subr.mxu0 0.0
        %1544 = vmatpush1.msra.mxu0 0.0
        %1545 = vmatprep.subr.mxu0 0.0
        %1546 = vmatpush1.msra.mxu0 0.0
        %1547 = vmatprep.subr.mxu0 0.0
        %1548 = vmatpush1.msra.mxu0 0.0
        %1549 = vmatprep.subr.mxu0 0.0
        %1550 = vmatpush1.msra.mxu0 0.0
        %1551 = vmatprep.subr.mxu0 0.0
        %1552 = vmatpush1.msra.mxu0 0.0
        %1553 = vmatprep.subr.mxu0 0.0
        %1554 = vmatpush1.msra.mxu0 0.0
        %1555 = vmatprep.subr.mxu0 0.0
        %1556 = vmatpush1.msra.mxu0 0.0
        %1557 = vmatprep.subr.mxu0 0.0
        %1558 = vmatpush1.msra.mxu0 0.0
        %1559 = vmatprep.subr.mxu0 0.0
        %1560 = vmatpush1.msra.mxu0 0.0
        %1561 = vmatprep.subr.mxu0 0.0
        %1562 = vmatpush1.msra.mxu0 0.0
        %1563 = vmatprep.subr.mxu0 0.0
        %1564 = vmatpush1.msra.mxu0 0.0
        %1565 = vmatprep.subr.mxu0 0.0
        %1566 = vmatpush1.msra.mxu0 0.0
        %1567 = vmatprep.subr.mxu0 0.0
        %1568 = vmatpush1.msra.mxu0 0.0
        %1569 = vmatprep.subr.mxu0 0.0
        %1570 = vmatpush1.msra.mxu0 0.0
        %1571 = vmatprep.subr.mxu0 0.0
        %1572 = vmatpush1.msra.mxu0 0.0
        %1573 = vmatprep.subr.mxu0 0.0
        %1574 = vmatpush1.msra.mxu0 0.0
        %1575 = vmatprep.subr.mxu0 0.0
        %1576 = vmatpush1.msra.mxu0 0.0
        %1577 = vmatprep.subr.mxu0 0.0
        %1578 = vmatpush1.msra.mxu0 0.0
        %1579 = vmatprep.subr.mxu0 0.0
        %1580 = vmatpush1.msra.mxu0 0.0
        %1581 = vmatprep.subr.mxu0 0.0
        %1582 = vmatpush1.msra.mxu0 0.0
        %1583 = vmatprep.subr.mxu0 0.0
        %1584 = vmatpush1.msra.mxu0 0.0
        %1585 = vmatprep.subr.mxu0 0.0
        %1586 = vmatpush1.msra.mxu0 0.0
        %1587 = vmatprep.subr.mxu0 0.0
        %1588 = vmatpush1.msra.mxu0 0.0
        %1589 = vmatprep.subr.mxu0 0.0
        %1590 = vmatpush1.msra.mxu0 0.0
        %1591 = vmatprep.subr.mxu0 0.0
        %1592 = vmatpush1.msra.mxu0 0.0
        %1593 = vmatprep.subr.mxu0 0.0
        %1594 = vmatpush1.msra.mxu0 0.0
        %1595 = vmatprep.subr.mxu0 0.0
        %1596 = vmatpush1.msra.mxu0 0.0
        %1597 = vmatprep.subr.mxu0 0.0
        %1598 = vmatpush1.msra.mxu0 0.0
        %1599 = vmatprep.mubr.f32.mxu0 0.0
        %1600 = vmatmul.mubr.f32.gmra.mrb[0].mxu0 %v1533
        %v1601 = vpop.f32.mrb[0].mxu0
        %v1602 = vadd.f32 0.0, %v1601
        %v1603 = vpop.f32.mrb[0].mxu0
        %1604 = vdwg.mxu0
        %v1605 = vmul.f32 %v935, %v1602
        %1606 = vxpose.xlu0.b32.start [1/16] %v934, 128
        %1607 = vxpose.xlu0.b32.cont [2/16] 0.0, 128
        %1608 = vxpose.xlu0.b32.cont [3/16] 0.0, 128
        %1609 = vxpose.xlu0.b32.cont [4/16] 0.0, 128
        %1610 = vxpose.xlu0.b32.cont [5/16] 0.0, 128
        %1611 = vxpose.xlu0.b32.cont [6/16] 0.0, 128
        %1612 = vxpose.xlu0.b32.cont [7/16] 0.0, 128
        %1613 = vxpose.xlu0.b32.cont [8/16] 0.0, 128
        %1614 = vxpose.xlu0.b32.cont [9/16] 0.0, 128
        %1615 = vxpose.xlu0.b32.cont [10/16] 0.0, 128
        %1616 = vxpose.xlu0.b32.cont [11/16] 0.0, 128
        %1617 = vxpose.xlu0.b32.cont [12/16] 0.0, 128
        %1618 = vxpose.xlu0.b32.cont [13/16] 0.0, 128
        %1619 = vxpose.xlu0.b32.cont [14/16] 0.0, 128
        %1620 = vxpose.xlu0.b32.cont [15/16] 0.0, 128
        %1621 = vxpose.xlu0.b32.end [16/16] 0.0, 128
        %v1622 = vpop.trf.xlu0
        %v1623 = vpop.trf.xlu0
        %v1624 = vpop.trf.xlu0
        %v1625 = vpop.trf.xlu0
        %v1626 = vpop.trf.xlu0
        %v1627 = vpop.trf.xlu0
        %v1628 = vpop.trf.xlu0
        %v1629 = vpop.trf.xlu0
        %v1630 = vpop.trf.xlu0
        %v1631 = vpop.trf.xlu0
        %v1632 = vpop.trf.xlu0
        %v1633 = vpop.trf.xlu0
        %v1634 = vpop.trf.xlu0
        %v1635 = vpop.trf.xlu0
        %v1636 = vpop.trf.xlu0
        %v1637 = vpop.trf.xlu0
        %vm1638 = vcmask 64512
        %v1640 = vsel %vm1638, %v1622, 0
        %v1643 = vsel %vm1638, %v1623, 0
        %v1646 = vsel %vm1638, %v1624, 0
        %v1649 = vsel %vm1638, %v1625, 0
        %1651 = vmatprep.subr.mxu0 0.0
        %1652 = vmatpush1.msra.mxu0 %v1605
        %1653 = vmatprep.subr.mxu0 0.0
        %1654 = vmatpush1.msra.mxu0 0.0
        %1655 = vmatprep.subr.mxu0 0.0
        %1656 = vmatpush1.msra.mxu0 0.0
        %1657 = vmatprep.subr.mxu0 0.0
        %1658 = vmatpush1.msra.mxu0 0.0
        %1659 = vmatprep.subr.mxu0 0.0
        %1660 = vmatpush1.msra.mxu0 0.0
        %1661 = vmatprep.subr.mxu0 0.0
        %1662 = vmatpush1.msra.mxu0 0.0
        %1663 = vmatprep.subr.mxu0 0.0
        %1664 = vmatpush1.msra.mxu0 0.0
        %1665 = vmatprep.subr.mxu0 0.0
        %1666 = vmatpush1.msra.mxu0 0.0
        %1667 = vmatprep.subr.mxu0 0.0
        %1668 = vmatpush1.msra.mxu0 0.0
        %1669 = vmatprep.subr.mxu0 0.0
        %1670 = vmatpush1.msra.mxu0 0.0
        %1671 = vmatprep.subr.mxu0 0.0
        %1672 = vmatpush1.msra.mxu0 0.0
        %1673 = vmatprep.subr.mxu0 0.0
        %1674 = vmatpush1.msra.mxu0 0.0
        %1675 = vmatprep.subr.mxu0 0.0
        %1676 = vmatpush1.msra.mxu0 0.0
        %1677 = vmatprep.subr.mxu0 0.0
        %1678 = vmatpush1.msra.mxu0 0.0
        %1679 = vmatprep.subr.mxu0 0.0
        %1680 = vmatpush1.msra.mxu0 0.0
        %1681 = vmatprep.subr.mxu0 0.0
        %1682 = vmatpush1.msra.mxu0 0.0
        %1683 = vmatprep.subr.mxu0 0.0
        %1684 = vmatpush1.msra.mxu0 0.0
        %1685 = vmatprep.subr.mxu0 0.0
        %1686 = vmatpush1.msra.mxu0 0.0
        %1687 = vmatprep.subr.mxu0 0.0
        %1688 = vmatpush1.msra.mxu0 0.0
        %1689 = vmatprep.subr.mxu0 0.0
        %1690 = vmatpush1.msra.mxu0 0.0
        %1691 = vmatprep.subr.mxu0 0.0
        %1692 = vmatpush1.msra.mxu0 0.0
        %1693 = vmatprep.subr.mxu0 0.0
        %1694 = vmatpush1.msra.mxu0 0.0
        %1695 = vmatprep.subr.mxu0 0.0
        %1696 = vmatpush1.msra.mxu0 0.0
        %1697 = vmatprep.subr.mxu0 0.0
        %1698 = vmatpush1.msra.mxu0 0.0
        %1699 = vmatprep.subr.mxu0 0.0
        %1700 = vmatpush1.msra.mxu0 0.0
        %1701 = vmatprep.subr.mxu0 0.0
        %1702 = vmatpush1.msra.mxu0 0.0
        %1703 = vmatprep.subr.mxu0 0.0
        %1704 = vmatpush1.msra.mxu0 0.0
        %1705 = vmatprep.subr.mxu0 0.0
        %1706 = vmatpush1.msra.mxu0 0.0
        %1707 = vmatprep.subr.mxu0 0.0
        %1708 = vmatpush1.msra.mxu0 0.0
        %1709 = vmatprep.subr.mxu0 0.0
        %1710 = vmatpush1.msra.mxu0 0.0
        %1711 = vmatprep.subr.mxu0 0.0
        %1712 = vmatpush1.msra.mxu0 0.0
        %1713 = vmatprep.subr.mxu0 0.0
        %1714 = vmatpush1.msra.mxu0 0.0
        %1715 = vmatprep.mubr.f32.mxu0 0.0
        %1716 = vmatmul.mubr.f32.gmra.mrb[0].mxu0 %v1640
        %v1717 = vpop.f32.mrb[0].mxu0
        %v1718 = vadd.f32 0.0, %v1717
        %v1719 = vpop.f32.mrb[0].mxu0
        %1720 = vmatprep.mubr.f32.mxu0 0.0
        %1721 = vmatmul.mubr.f32.gmra.mrb[0].mxu0 %v1643
        %v1722 = vpop.f32.mrb[0].mxu0
        %v1723 = vadd.f32 0.0, %v1722
        %v1724 = vpop.f32.mrb[0].mxu0
        %1725 = vmatprep.mubr.f32.mxu0 0.0
        %1726 = vmatmul.mubr.f32.gmra.mrb[0].mxu0 %v1646
        %v1727 = vpop.f32.mrb[0].mxu0
        %v1728 = vadd.f32 0.0, %v1727
        %v1729 = vpop.f32.mrb[0].mxu0
        %1730 = vmatprep.mubr.f32.mxu0 0.0
        %1731 = vmatmul.mubr.f32.gmra.mrb[0].mxu0 %v1649
        %v1732 = vpop.f32.mrb[0].mxu0
        %v1733 = vadd.f32 0.0, %v1732
        %v1734 = vpop.f32.mrb[0].mxu0
        %1735 = vdwg.mxu0
        %v1736 = vld [vmem:[#allocation19] sm:$0xff]
        %v1737 = vld [vmem:[#allocation19 + $0x8] sm:$0xff]
        %v1738 = vld [vmem:[#allocation19 + $0x10] sm:$0xff]
        %v1739 = vld [vmem:[#allocation19 + $0x18] sm:$0xff]
        %v1740 = vmul.f32 %v1718, %v1736
        %v1741 = vmul.f32 %v1723, %v1737
        %v1742 = vmul.f32 %v1728, %v1738
        %v1743 = vmul.f32 %v1733, %v1739
        %v1745 = vsel %vm676, %v1271, 0
        %1747 = vmatprep.subr.mxu0 0.0
        %1748 = vmatpush1.msra.mxu0 %v1740
        %1749 = vmatprep.subr.mxu0 0.0
        %1750 = vmatpush1.msra.mxu0 %v1741
        %1751 = vmatprep.subr.mxu0 0.0
        %1752 = vmatpush1.msra.mxu0 %v1742
        %1753 = vmatprep.subr.mxu0 0.0
        %1754 = vmatpush1.msra.mxu0 %v1743
        %1755 = vmatprep.subr.mxu0 0.0
        %1756 = vmatpush1.msra.mxu0 0.0
        %1757 = vmatprep.subr.mxu0 0.0
        %1758 = vmatpush1.msra.mxu0 0.0
        %1759 = vmatprep.subr.mxu0 0.0
        %1760 = vmatpush1.msra.mxu0 0.0
        %1761 = vmatprep.subr.mxu0 0.0
        %1762 = vmatpush1.msra.mxu0 0.0
        %1763 = vmatprep.subr.mxu0 0.0
        %1764 = vmatpush1.msra.mxu0 0.0
        %1765 = vmatprep.subr.mxu0 0.0
        %1766 = vmatpush1.msra.mxu0 0.0
        %1767 = vmatprep.subr.mxu0 0.0
        %1768 = vmatpush1.msra.mxu0 0.0
        %1769 = vmatprep.subr.mxu0 0.0
        %1770 = vmatpush1.msra.mxu0 0.0
        %1771 = vmatprep.subr.mxu0 0.0
        %1772 = vmatpush1.msra.mxu0 0.0
        %1773 = vmatprep.subr.mxu0 0.0
        %1774 = vmatpush1.msra.mxu0 0.0
        %1775 = vmatprep.subr.mxu0 0.0
        %1776 = vmatpush1.msra.mxu0 0.0
        %1777 = vmatprep.subr.mxu0 0.0
        %1778 = vmatpush1.msra.mxu0 0.0
        %1779 = vmatprep.subr.mxu0 0.0
        %1780 = vmatpush1.msra.mxu0 0.0
        %1781 = vmatprep.subr.mxu0 0.0
        %1782 = vmatpush1.msra.mxu0 0.0
        %1783 = vmatprep.subr.mxu0 0.0
        %1784 = vmatpush1.msra.mxu0 0.0
        %1785 = vmatprep.subr.mxu0 0.0
        %1786 = vmatpush1.msra.mxu0 0.0
        %1787 = vmatprep.subr.mxu0 0.0
        %1788 = vmatpush1.msra.mxu0 0.0
        %1789 = vmatprep.subr.mxu0 0.0
        %1790 = vmatpush1.msra.mxu0 0.0
        %1791 = vmatprep.subr.mxu0 0.0
        %1792 = vmatpush1.msra.mxu0 0.0
        %1793 = vmatprep.subr.mxu0 0.0
        %1794 = vmatpush1.msra.mxu0 0.0
        %1795 = vmatprep.subr.mxu0 0.0
        %1796 = vmatpush1.msra.mxu0 0.0
        %1797 = vmatprep.subr.mxu0 0.0
        %1798 = vmatpush1.msra.mxu0 0.0
        %1799 = vmatprep.subr.mxu0 0.0
        %1800 = vmatpush1.msra.mxu0 0.0
        %1801 = vmatprep.subr.mxu0 0.0
        %1802 = vmatpush1.msra.mxu0 0.0
        %1803 = vmatprep.subr.mxu0 0.0
        %1804 = vmatpush1.msra.mxu0 0.0
        %1805 = vmatprep.subr.mxu0 0.0
        %1806 = vmatpush1.msra.mxu0 0.0
        %1807 = vmatprep.subr.mxu0 0.0
        %1808 = vmatpush1.msra.mxu0 0.0
        %1809 = vmatprep.subr.mxu0 0.0
        %1810 = vmatpush1.msra.mxu0 0.0
        %1811 = vmatprep.mubr.f32.mxu0 0.0
        %1812 = vmatmul.mubr.f32.gmra.mrb[0].mxu0 %v1745
        %v1813 = vpop.f32.mrb[0].mxu0
        %v1814 = vadd.f32 0.0, %v1813
        %v1815 = vpop.f32.mrb[0].mxu0
        %1816 = vdwg.mxu0
        %v1817 = vmul.f32 %v1814, %v1529
        %v1818 = vld [vmem:[%s9] sm:$0xff]
        %v1819 = vld [vmem:[%s9 + $0x8] sm:$0xff]
        %v1820 = vld [vmem:[%s9 + $0x10] sm:$0xff]
        %v1821 = vld [vmem:[%s9 + $0x18] sm:$0xff]
        %v1822 = vld [vmem:[#allocation17] sm:$0x1]
        %v1824 = vlaneseq
        %v1825 = vshrl.u32 %v1824, 7
        %v1826 = vsub.s32 0, %v1825
        %v1827 = vrot.slane %v1822, %v1826
        %v1830 = vsel %vm676, %v1817, 0
        %1832 = vmatprep.subr.mxu0 0.0
        %1833 = vmatpush1.msra.mxu0 %v1818
        %1834 = vmatprep.subr.mxu0 0.0
        %1835 = vmatpush1.msra.mxu0 %v1819
        %1836 = vmatprep.subr.mxu0 0.0
        %1837 = vmatpush1.msra.mxu0 %v1820
        %1838 = vmatprep.subr.mxu0 0.0
        %1839 = vmatpush1.msra.mxu0 %v1821
        %1840 = vmatprep.subr.mxu0 0.0
        %1841 = vmatpush1.msra.mxu0 0.0
        %1842 = vmatprep.subr.mxu0 0.0
        %1843 = vmatpush1.msra.mxu0 0.0
        %1844 = vmatprep.subr.mxu0 0.0
        %1845 = vmatpush1.msra.mxu0 0.0
        %1846 = vmatprep.subr.mxu0 0.0
        %1847 = vmatpush1.msra.mxu0 0.0
        %1848 = vmatprep.subr.mxu0 0.0
        %1849 = vmatpush1.msra.mxu0 0.0
        %1850 = vmatprep.subr.mxu0 0.0
        %1851 = vmatpush1.msra.mxu0 0.0
        %1852 = vmatprep.subr.mxu0 0.0
        %1853 = vmatpush1.msra.mxu0 0.0
        %1854 = vmatprep.subr.mxu0 0.0
        %1855 = vmatpush1.msra.mxu0 0.0
        %1856 = vmatprep.subr.mxu0 0.0
        %1857 = vmatpush1.msra.mxu0 0.0
        %1858 = vmatprep.subr.mxu0 0.0
        %1859 = vmatpush1.msra.mxu0 0.0
        %1860 = vmatprep.subr.mxu0 0.0
        %1861 = vmatpush1.msra.mxu0 0.0
        %1862 = vmatprep.subr.mxu0 0.0
        %1863 = vmatpush1.msra.mxu0 0.0
        %1864 = vmatprep.subr.mxu0 0.0
        %1865 = vmatpush1.msra.mxu0 0.0
        %1866 = vmatprep.subr.mxu0 0.0
        %1867 = vmatpush1.msra.mxu0 0.0
        %1868 = vmatprep.subr.mxu0 0.0
        %1869 = vmatpush1.msra.mxu0 0.0
        %1870 = vmatprep.subr.mxu0 0.0
        %1871 = vmatpush1.msra.mxu0 0.0
        %1872 = vmatprep.subr.mxu0 0.0
        %1873 = vmatpush1.msra.mxu0 0.0
        %1874 = vmatprep.subr.mxu0 0.0
        %1875 = vmatpush1.msra.mxu0 0.0
        %1876 = vmatprep.subr.mxu0 0.0
        %1877 = vmatpush1.msra.mxu0 0.0
        %1878 = vmatprep.subr.mxu0 0.0
        %1879 = vmatpush1.msra.mxu0 0.0
        %1880 = vmatprep.subr.mxu0 0.0
        %1881 = vmatpush1.msra.mxu0 0.0
        %1882 = vmatprep.subr.mxu0 0.0
        %1883 = vmatpush1.msra.mxu0 0.0
        %1884 = vmatprep.subr.mxu0 0.0
        %1885 = vmatpush1.msra.mxu0 0.0
        %1886 = vmatprep.subr.mxu0 0.0
        %1887 = vmatpush1.msra.mxu0 0.0
        %1888 = vmatprep.subr.mxu0 0.0
        %1889 = vmatpush1.msra.mxu0 0.0
        %1890 = vmatprep.subr.mxu0 0.0
        %1891 = vmatpush1.msra.mxu0 0.0
        %1892 = vmatprep.subr.mxu0 0.0
        %1893 = vmatpush1.msra.mxu0 0.0
        %1894 = vmatprep.subr.mxu0 0.0
        %1895 = vmatpush1.msra.mxu0 0.0
        %1896 = vmatprep.mubr.f32.mxu0 0.0
        %1897 = vmatmul.mubr.f32.gmra.mrb[0].mxu0 %v1830
        %v1898 = vpop.f32.mrb[0].mxu0
        %v1899 = vadd.f32 %v1827, %v1898
        %v1900 = vpop.f32.mrb[0].mxu0
        %1901 = vdwg.mxu0
        %1902 = vst.msk [vmem:[%s661] sm:$0xff] %vm676, %v1899
        %s1903 = sand.u32 %s376, 1
        %s1904 = scalar_lea.sflag [#allocation7], %s1903
        %s1905 = sand.u32 %s376, 1
        %s1906 = smul.addr %s1905, 8
        %s1907 = scalar_lea.vmem [#allocation20], %s1906
        // Predicated region
        $region117: #{tpu_custom_call.1} parent=79 // pred_check
          %p1908 = pneg %p386
        $region118: #{tpu_custom_call.1} parent=79 // pred_check_branch
          %1910 = sbr.rel (%p1908) target = $region120
        $region119: #{tpu_custom_call.1} parent=79 // pred_region
          %s1912 = ssub.s32 128, 128
          %1913 = vsyncadd %s1904, %s1912
          %s1914 = smul.addr %s38, 128
          %s1915 = scalar_lea.hbm %s15, %s1914
          %s1917 = sshll.u32 %s1907, 4
          %s1918 = int_to_ptr.vmem [resolvable:$true] %s1917
          %1920 = dma.vmem_to_hbm [thread:$0]  %s1918, 128, %s1915, %s1904
        $region120: #{tpu_custom_call.1} parent=79 // pred_fallthru
          _
      $region80: #{tpu_custom_call.1} parent=5 // pred_fallthru
        _
      %p1921 = scmp.le.s32.totalorder 2, %s33
      // Predicated region
      $region121: #{tpu_custom_call.1} parent=5 // pred_check
        %p1922 = pneg %p1921
      $region122: #{tpu_custom_call.1} parent=5 // pred_check_branch
        %1924 = sbr.rel (%p1922) target = $region124
      $region123: #{tpu_custom_call.1} parent=5 // pred_region
        %s1925 = ssub.s32 %s33, 2
        // Predicated region
        $region125: #{tpu_custom_call.1} parent=123 // pred_check
          %p1926 = pneg %p392
        $region126: #{tpu_custom_call.1} parent=123 // pred_check_branch
          %1928 = sbr.rel (%p1926) target = $region128
        $region127: #{tpu_custom_call.1} parent=123 // pred_region
          %s1929 = sand.u32 %s377, 1
          %s1930 = scalar_lea.sflag [#allocation7], %s1929
          %s1931 = sand.u32 %s377, 1
          %s1932 = smul.addr %s1931, 8
          %s1933 = scalar_lea.vmem [#allocation20], %s1932
          %1934 = dma.done %s1930, 128
        $region128: #{tpu_custom_call.1} parent=123 // pred_fallthru
          _
      $region124: #{tpu_custom_call.1} parent=5 // pred_fallthru
        _
    $region6: #{tpu_custom_call.1} parent=1 // loop_footer
      %s37 = sadd.s32 1, %s33
    $region7: #{tpu_custom_call.1} parent=1 // loop_footer_branch
      %32 = sbr.rel target = $region3
    $region8: #{tpu_custom_call.1} parent=1 // loop_exit
      _
    %1935 = vsyncpa [#allocation6], 1
    %s1936 = scalar_lea.sflag [#allocation6], 1
    %1937 = vsyncpa %s1936, 1
    %1938 = vsyncpa [#allocation9], 1
    %s1939 = scalar_lea.sflag [#allocation9], 1
    %1940 = vsyncpa %s1939, 1
    %1941 = vsyncpa [#allocation12], 1
    %1942 = vsyncpa [#allocation15], 1
    %1943 = vsyncpa [#allocation18], 1
    %1944 = vsyncpa [#allocation7], 1
    %s1945 = scalar_lea.sflag [#allocation7], 1
    %1946 = vsyncpa %s1945, 1

</llo_original>
